<compile_context>
chip_gen: v7x
topology: tpu7x:2x2x1
jax: 0.10.0
libtpu: 0.0.40
codegen_flags: <defaults>
</compile_context>

<pallas_src>
import math
from functools import partial

import jax
import jax.numpy as jnp
from jax.experimental import pallas as pl
from jax.experimental.pallas import tpu as pltpu


def _informer_block_kernel(x_ref,
                           wqkv_ref, bqkv_ref, wo_ref, bo_ref,
                           g1_ref, be1_ref,
                           w1_ref, b1_ref, w2_ref, b2_ref,
                           g2_ref, be2_ref,
                           out_ref,
                           *, n_heads, matmul_dtype):
    x = x_ref[0]                               # (L, D) — one batch element per grid step
    L, D = x.shape
    dk = D // n_heads
    inv_d = 1.0 / D
    eps = 1e-5
    inv_sqrt2 = 1.0 / math.sqrt(2.0)
    f32 = jnp.float32

    # cast each activation slab exactly once (no-op when matmul dtype is f32)
    cast = (lambda a: a) if matmul_dtype == f32 else (lambda a: a.astype(matmul_dtype))

    def mm(a_cast, w_ref):                     # (m, k) @ (k, n), f32 accumulation
        return jax.lax.dot_general(a_cast, w_ref[...], (((1,), (0,)), ((), ())),
                                   preferred_element_type=f32)

    # ---- fused QKV projection (attention scale pre-folded into Q columns) ----
    xm = cast(x)
    qkv = mm(xm, wqkv_ref) + bqkv_ref[...]     # (L, 3D) f32
    qkv_m = cast(qkv)

    # ---- multi-head attention (degenerate ProbAttention == full attention) ----
    ctx_heads = []
    for h in range(n_heads):                   # static loop, H is tiny
        q_h = qkv_m[:, h * dk:(h + 1) * dk]
        k_h = qkv_m[:, D + h * dk:D + (h + 1) * dk]
        v_h = qkv_m[:, 2 * D + h * dk:2 * D + (h + 1) * dk]
        # contract last dims of both operands (no explicit K transpose materialized)
        s = jax.lax.dot_general(q_h, k_h, (((1,), (1,)), ((), ())),
                                preferred_element_type=f32)          # (L, L)
        s = s - jnp.max(s, axis=-1, keepdims=True)
        p = jnp.exp(s)
        l = jnp.sum(p, axis=-1, keepdims=True)
        inv_l = pl.reciprocal(l, approx=True)                        # EUP slot
        inv_l = inv_l * (2.0 - l * inv_l)                            # one NR step -> ~exact
        p = p * inv_l
        ctx_heads.append(jax.lax.dot_general(cast(p), v_h, (((1,), (0,)), ((), ())),
                                             preferred_element_type=f32))
    ctx = jnp.concatenate(ctx_heads, axis=-1)                        # (L, D), head-concat

    # ---- single full-width output projection ----
    attn_out = mm(cast(ctx), wo_ref) + bo_ref[...]

    # ---- residual + LayerNorm (centered two-pass moments) ----
    def layer_norm(h, g, b):
        mu = jnp.sum(h, axis=-1, keepdims=True) * inv_d
        hc = h - mu
        var = jnp.sum(hc * hc, axis=-1, keepdims=True) * inv_d
        return hc * jax.lax.rsqrt(var + eps) * g + b

    xn = layer_norm(x + attn_out, g1_ref[...], be1_ref[...])

    # ---- FFN: conv1d(k=1) -> exact GELU -> conv1d(k=1) ----
    y = mm(cast(xn), w1_ref) + b1_ref[...]
    y = 0.5 * y * (1.0 + jax.lax.erf(y * inv_sqrt2))                 # nn.GELU (erf form)
    y = mm(cast(y), w2_ref) + b2_ref[...]

    out = layer_norm(xn + y, g2_ref[...], be2_ref[...])
    out_ref[0] = out.astype(out_ref.dtype)


def informer_encoder_block(x, params, *, n_heads, factor=5, use_bf16_matmul=False,
                           vmem_limit_bytes=48 * 1024 * 1024):
    B, L, D = x.shape
    assert D % n_heads == 0
    dk = D // n_heads
    d_ff = params["w1"].shape[1]

    # ProbAttention degenerates to full attention only under this condition.
    u = factor * int(math.ceil(math.log(L)))
    assert u >= L, "shapes chosen so ProbAttention == full attention (u >= L_Q)"

    matmul_dtype = jnp.bfloat16 if use_bf16_matmul else jnp.float32

    # Fused QKV weight, (D, 3D); the 1/sqrt(dk) score scale is folded into the Q slice.
    scale = 1.0 / math.sqrt(dk)
    wqkv = jnp.concatenate([params["wq"] * scale, params["wk"], params["wv"]], axis=1)
    bqkv = jnp.concatenate([params["bq"] * scale, params["bk"], params["bv"]], axis=1)

    def wcast(w):  # pre-cast MXU weight operands wrapper-side
        return w.astype(matmul_dtype) if use_bf16_matmul else w

    args = [wcast(wqkv), bqkv, wcast(params["wo"]), params["bo"],
            params["g1"], params["be1"],
            wcast(params["w1"]), params["b1"], wcast(params["w2"]), params["b2"],
            params["g2"], params["be2"]]

    kernel = partial(_informer_block_kernel, n_heads=n_heads, matmul_dtype=matmul_dtype)

    # x/out tiled per batch element; weights get constant index_maps (VMEM-resident).
    x_spec = pl.BlockSpec((1, L, D), lambda b: (b, 0, 0))
    weight_specs = [pl.BlockSpec(a.shape, lambda b: (0, 0)) for a in args]

    out = pl.pallas_call(
        kernel,
        out_shape=jax.ShapeDtypeStruct((B, L, D), jnp.float32),
        grid=(B,),
        in_specs=[x_spec] + weight_specs,
        out_specs=pl.BlockSpec((1, L, D), lambda b: (b, 0, 0)),
        compiler_params=pltpu.CompilerParams(
            dimension_semantics=("parallel",),          # 2-TC sharding on v7x
            vmem_limit_bytes=vmem_limit_bytes),         # tune per generation / real sizes
    )(x, *args)

    return out


def _init_params(key, d_model, d_ff):
    ks = jax.random.split(key, 8)
    s = 0.05
    return {
        # nn.Linear weights pre-transposed to (in, out)
        "wq": jax.random.normal(ks[0], (d_model, d_model), jnp.float32) * s,
        "wk": jax.random.normal(ks[1], (d_model, d_model), jnp.float32) * s,
        "wv": jax.random.normal(ks[2], (d_model, d_model), jnp.float32) * s,
        "wo": jax.random.normal(ks[3], (d_model, d_model), jnp.float32) * s,
        "bq": jax.random.normal(ks[4], (1, d_model), jnp.float32) * s,
        "bk": jax.random.normal(ks[5], (1, d_model), jnp.float32) * s,
        "bv": jax.random.normal(ks[6], (1, d_model), jnp.float32) * s,
        "bo": jnp.zeros((1, d_model), jnp.float32),
        # conv1 / conv2 (kernel_size=1) as (in, out) matmul weights
        "w1": jax.random.normal(ks[7], (d_model, d_ff), jnp.float32) * s,
        "b1": jnp.zeros((1, d_ff), jnp.float32),
        "w2": jax.random.normal(jax.random.fold_in(key, 99), (d_ff, d_model),
                                jnp.float32) * s,
        "b2": jnp.zeros((1, d_model), jnp.float32),
        # LayerNorm affine params (PyTorch default init: ones / zeros)
        "g1": jnp.ones((1, d_model), jnp.float32),
        "be1": jnp.zeros((1, d_model), jnp.float32),
        "g2": jnp.ones((1, d_model), jnp.float32),
        "be2": jnp.zeros((1, d_model), jnp.float32),
    }


def _reference(x, params, n_heads):
    # Pure-JAX reference of the PyTorch block (degenerate ProbAttention path).
    B, L, D = x.shape
    dk = D // n_heads

    def ln(h, g, b):
        mu = jnp.mean(h, -1, keepdims=True)
        var = jnp.mean((h - mu) ** 2, -1, keepdims=True)
        return (h - mu) / jnp.sqrt(var + 1e-5) * g + b

    q = x @ params["wq"] + params["bq"]
    k = x @ params["wk"] + params["bk"]
    v = x @ params["wv"] + params["bv"]

    def split(t):
        return t.reshape(B, L, n_heads, dk).transpose(0, 2, 1, 3)   # (B,H,L,dk)

    qh, kh, vh = split(q), split(k), split(v)
    s = jnp.einsum('bhqd,bhkd->bhqk', qh, kh) / math.sqrt(dk)
    p = jax.nn.softmax(s, axis=-1)
    ctx = jnp.einsum('bhqk,bhkd->bhqd', p, vh).transpose(0, 2, 1, 3).reshape(B, L, D)
    attn = ctx @ params["wo"] + params["bo"]
    xn = ln(x + attn, params["g1"], params["be1"])
    y = xn @ params["w1"] + params["b1"]
    y = 0.5 * y * (1.0 + jax.lax.erf(y / math.sqrt(2.0)))
    y = y @ params["w2"] + params["b2"]
    return ln(xn + y, params["g2"], params["be2"])


if __name__ == "__main__":
    B, L, d_model, n_heads, d_ff = 2, 8, 32, 2, 64

    key = jax.random.PRNGKey(0)
    kx, kp = jax.random.split(key)
    x = jax.random.normal(kx, (B, L, d_model), jnp.float32)
    params = _init_params(kp, d_model, d_ff)

    out = informer_encoder_block(x, params, n_heads=n_heads, factor=5,
                                 use_bf16_matmul=False)
    out = jax.block_until_ready(out)

    assert out.shape == (B, L, d_model) and out.dtype == jnp.float32
    assert bool(jnp.all(jnp.isfinite(out)))

    # sanity check vs pure-JAX reference (tight: NR-refined softmax reciprocal)
    ref = _reference(x, params, n_heads)
    max_err = float(jnp.max(jnp.abs(out - ref)))
    assert max_err < 5e-3, f"mismatch vs reference: {max_err}"

    print("KERNEL_OK")
</pallas_src>

<mosaic_0001>
module attributes {stable_mosaic.version = 11 : i64} {
  func.func @_informer_block_kernel(%arg0: i32, %arg1: memref<1x8x32xf32, #tpu.memory_space<vmem>>, %arg2: memref<32x96xf32, #tpu.memory_space<vmem>>, %arg3: memref<1x96xf32, #tpu.memory_space<vmem>>, %arg4: memref<32x32xf32, #tpu.memory_space<vmem>>, %arg5: memref<1x32xf32, #tpu.memory_space<vmem>>, %arg6: memref<1x32xf32, #tpu.memory_space<vmem>>, %arg7: memref<1x32xf32, #tpu.memory_space<vmem>>, %arg8: memref<32x64xf32, #tpu.memory_space<vmem>>, %arg9: memref<1x64xf32, #tpu.memory_space<vmem>>, %arg10: memref<64x32xf32, #tpu.memory_space<vmem>>, %arg11: memref<1x32xf32, #tpu.memory_space<vmem>>, %arg12: memref<1x32xf32, #tpu.memory_space<vmem>>, %arg13: memref<1x32xf32, #tpu.memory_space<vmem>>, %arg14: memref<1x8x32xf32, #tpu.memory_space<vmem>>) attributes {dimension_semantics = [#tpu.dimension_semantics<parallel>], iteration_bounds = array<i64: 2>, scalar_prefetch = 0 : i64, scratch_operands = 0 : i64, tpu.core_type = #tpu.core_type<tc>, window_params = [{transform_indices = @transform_0, window_bounds = array<i64: 1, 8, 32>}, {pipeline_mode = #tpu.pipeline_mode<synchronous>, transform_indices = @transform_1, window_bounds = array<i64: 32, 96>}, {pipeline_mode = #tpu.pipeline_mode<synchronous>, transform_indices = @transform_2, window_bounds = array<i64: 1, 96>}, {pipeline_mode = #tpu.pipeline_mode<synchronous>, transform_indices = @transform_3, window_bounds = array<i64: 32, 32>}, {pipeline_mode = #tpu.pipeline_mode<synchronous>, transform_indices = @transform_4, window_bounds = array<i64: 1, 32>}, {pipeline_mode = #tpu.pipeline_mode<synchronous>, transform_indices = @transform_5, window_bounds = array<i64: 1, 32>}, {pipeline_mode = #tpu.pipeline_mode<synchronous>, transform_indices = @transform_6, window_bounds = array<i64: 1, 32>}, {pipeline_mode = #tpu.pipeline_mode<synchronous>, transform_indices = @transform_7, window_bounds = array<i64: 32, 64>}, {pipeline_mode = #tpu.pipeline_mode<synchronous>, transform_indices = @transform_8, window_bounds = array<i64: 1, 64>}, {pipeline_mode = #tpu.pipeline_mode<synchronous>, transform_indices = @transform_9, window_bounds = array<i64: 64, 32>}, {pipeline_mode = #tpu.pipeline_mode<synchronous>, transform_indices = @transform_10, window_bounds = array<i64: 1, 32>}, {pipeline_mode = #tpu.pipeline_mode<synchronous>, transform_indices = @transform_11, window_bounds = array<i64: 1, 32>}, {pipeline_mode = #tpu.pipeline_mode<synchronous>, transform_indices = @transform_12, window_bounds = array<i64: 1, 32>}, {transform_indices = @transform_13, window_bounds = array<i64: 1, 8, 32>}]} {
    %c0 = arith.constant 0 : index
    %c0_0 = arith.constant 0 : index
    %c0_1 = arith.constant 0 : index
    %0 = vector.load %arg1[%c0, %c0_0, %c0_1] : memref<1x8x32xf32, #tpu.memory_space<vmem>>, vector<1x8x32xf32>
    %1 = vector.shape_cast %0 : vector<1x8x32xf32> to vector<8x32xf32>
    %c0_2 = arith.constant 0 : index
    %c0_3 = arith.constant 0 : index
    %2 = vector.load %arg2[%c0_2, %c0_3] : memref<32x96xf32, #tpu.memory_space<vmem>>, vector<32x96xf32>
    %cst = arith.constant dense<0.000000e+00> : vector<8x96xf32>
    %3 = tpu.matmul %1, %2, %cst {dimension_numbers = #tpu.dot_dimension_numbers<[1], [0], [0], [1], [0, 0, 1, 1], [], []>} : vector<8x32xf32>, vector<32x96xf32>, vector<8x96xf32> -> vector<8x96xf32>
    %c0_4 = arith.constant 0 : index
    %c0_5 = arith.constant 0 : index
    %4 = vector.load %arg3[%c0_4, %c0_5] : memref<1x96xf32, #tpu.memory_space<vmem>>, vector<1x96xf32>
    %5 = vector.broadcast %4 : vector<1x96xf32> to vector<8x96xf32>
    %6 = arith.addf %3, %5 : vector<8x96xf32>
    %7 = vector.extract_strided_slice %6 {offsets = [0, 0], sizes = [8, 16], strides = [1, 1]} : vector<8x96xf32> to vector<8x16xf32>
    %8 = vector.extract_strided_slice %6 {offsets = [0, 32], sizes = [8, 16], strides = [1, 1]} : vector<8x96xf32> to vector<8x16xf32>
    %9 = vector.extract_strided_slice %6 {offsets = [0, 64], sizes = [8, 16], strides = [1, 1]} : vector<8x96xf32> to vector<8x16xf32>
    %cst_6 = arith.constant dense<0.000000e+00> : vector<8x8xf32>
    %10 = tpu.matmul %7, %8, %cst_6 {dimension_numbers = #tpu.dot_dimension_numbers<[1], [1], [0], [0], [0, 0, 1, 0], [], []>} : vector<8x16xf32>, vector<8x16xf32>, vector<8x8xf32> -> vector<8x8xf32>
    %cst_7 = arith.constant dense<0xFF800000> : vector<8xf32>
    %11 = vector.multi_reduction <maximumf>, %10, %cst_7 [1] : vector<8x8xf32> to vector<8xf32>
    %12 = vector.shape_cast %11 : vector<8xf32> to vector<8x1xf32>
    %13 = vector.broadcast %12 : vector<8x1xf32> to vector<8x8xf32>
    %14 = arith.subf %10, %13 : vector<8x8xf32>
    %15 = math.exp %14 : vector<8x8xf32>
    %cst_8 = arith.constant dense<0.000000e+00> : vector<8xf32>
    %16 = vector.multi_reduction <add>, %15, %cst_8 [1] : vector<8x8xf32> to vector<8xf32>
    %17 = vector.shape_cast %16 : vector<8xf32> to vector<8x1xf32>
    %18 = tpu.reciprocal %17 {approx = true} : vector<8x1xf32> -> vector<8x1xf32>
    %19 = arith.mulf %17, %18 : vector<8x1xf32>
    %cst_9 = arith.constant 2.000000e+00 : f32
    %20 = vector.broadcast %cst_9 : f32 to vector<8x1xf32>
    %21 = arith.subf %20, %19 : vector<8x1xf32>
    %22 = arith.mulf %18, %21 : vector<8x1xf32>
    %23 = vector.broadcast %22 : vector<8x1xf32> to vector<8x8xf32>
    %24 = arith.mulf %15, %23 : vector<8x8xf32>
    %cst_10 = arith.constant dense<0.000000e+00> : vector<8x16xf32>
    %25 = tpu.matmul %24, %9, %cst_10 {dimension_numbers = #tpu.dot_dimension_numbers<[1], [0], [0], [1], [0, 0, 1, 1], [], []>} : vector<8x8xf32>, vector<8x16xf32>, vector<8x16xf32> -> vector<8x16xf32>
    %26 = vector.extract_strided_slice %6 {offsets = [0, 16], sizes = [8, 16], strides = [1, 1]} : vector<8x96xf32> to vector<8x16xf32>
    %27 = vector.extract_strided_slice %6 {offsets = [0, 48], sizes = [8, 16], strides = [1, 1]} : vector<8x96xf32> to vector<8x16xf32>
    %28 = vector.extract_strided_slice %6 {offsets = [0, 80], sizes = [8, 16], strides = [1, 1]} : vector<8x96xf32> to vector<8x16xf32>
    %cst_11 = arith.constant dense<0.000000e+00> : vector<8x8xf32>
    %29 = tpu.matmul %26, %27, %cst_11 {dimension_numbers = #tpu.dot_dimension_numbers<[1], [1], [0], [0], [0, 0, 1, 0], [], []>} : vector<8x16xf32>, vector<8x16xf32>, vector<8x8xf32> -> vector<8x8xf32>
    %cst_12 = arith.constant dense<0xFF800000> : vector<8xf32>
    %30 = vector.multi_reduction <maximumf>, %29, %cst_12 [1] : vector<8x8xf32> to vector<8xf32>
    %31 = vector.shape_cast %30 : vector<8xf32> to vector<8x1xf32>
    %32 = vector.broadcast %31 : vector<8x1xf32> to vector<8x8xf32>
    %33 = arith.subf %29, %32 : vector<8x8xf32>
    %34 = math.exp %33 : vector<8x8xf32>
    %cst_13 = arith.constant dense<0.000000e+00> : vector<8xf32>
    %35 = vector.multi_reduction <add>, %34, %cst_13 [1] : vector<8x8xf32> to vector<8xf32>
    %36 = vector.shape_cast %35 : vector<8xf32> to vector<8x1xf32>
    %37 = tpu.reciprocal %36 {approx = true} : vector<8x1xf32> -> vector<8x1xf32>
    %38 = arith.mulf %36, %37 : vector<8x1xf32>
    %cst_14 = arith.constant 2.000000e+00 : f32
    %39 = vector.broadcast %cst_14 : f32 to vector<8x1xf32>
    %40 = arith.subf %39, %38 : vector<8x1xf32>
    %41 = arith.mulf %37, %40 : vector<8x1xf32>
    %42 = vector.broadcast %41 : vector<8x1xf32> to vector<8x8xf32>
    %43 = arith.mulf %34, %42 : vector<8x8xf32>
    %cst_15 = arith.constant dense<0.000000e+00> : vector<8x16xf32>
    %44 = tpu.matmul %43, %28, %cst_15 {dimension_numbers = #tpu.dot_dimension_numbers<[1], [0], [0], [1], [0, 0, 1, 1], [], []>} : vector<8x8xf32>, vector<8x16xf32>, vector<8x16xf32> -> vector<8x16xf32>
    %45 = tpu.concatenate %25, %44 in 1 : vector<8x16xf32>, vector<8x16xf32> -> vector<8x32xf32>
    %c0_16 = arith.constant 0 : index
    %c0_17 = arith.constant 0 : index
    %46 = vector.load %arg4[%c0_16, %c0_17] : memref<32x32xf32, #tpu.memory_space<vmem>>, vector<32x32xf32>
    %cst_18 = arith.constant dense<0.000000e+00> : vector<8x32xf32>
    %47 = tpu.matmul %45, %46, %cst_18 {dimension_numbers = #tpu.dot_dimension_numbers<[1], [0], [0], [1], [0, 0, 1, 1], [], []>} : vector<8x32xf32>, vector<32x32xf32>, vector<8x32xf32> -> vector<8x32xf32>
    %c0_19 = arith.constant 0 : index
    %c0_20 = arith.constant 0 : index
    %48 = vector.load %arg5[%c0_19, %c0_20] : memref<1x32xf32, #tpu.memory_space<vmem>>, vector<1x32xf32>
    %49 = vector.broadcast %48 : vector<1x32xf32> to vector<8x32xf32>
    %50 = arith.addf %47, %49 : vector<8x32xf32>
    %51 = arith.addf %1, %50 : vector<8x32xf32>
    %c0_21 = arith.constant 0 : index
    %c0_22 = arith.constant 0 : index
    %52 = vector.load %arg6[%c0_21, %c0_22] : memref<1x32xf32, #tpu.memory_space<vmem>>, vector<1x32xf32>
    %c0_23 = arith.constant 0 : index
    %c0_24 = arith.constant 0 : index
    %53 = vector.load %arg7[%c0_23, %c0_24] : memref<1x32xf32, #tpu.memory_space<vmem>>, vector<1x32xf32>
    %cst_25 = arith.constant dense<0.000000e+00> : vector<8xf32>
    %54 = vector.multi_reduction <add>, %51, %cst_25 [1] : vector<8x32xf32> to vector<8xf32>
    %55 = vector.shape_cast %54 : vector<8xf32> to vector<8x1xf32>
    %cst_26 = arith.constant 3.125000e-02 : f32
    %56 = vector.broadcast %cst_26 : f32 to vector<8x1xf32>
    %57 = arith.mulf %55, %56 : vector<8x1xf32>
    %58 = vector.broadcast %57 : vector<8x1xf32> to vector<8x32xf32>
    %59 = arith.subf %51, %58 : vector<8x32xf32>
    %60 = arith.mulf %59, %59 : vector<8x32xf32>
    %cst_27 = arith.constant dense<0.000000e+00> : vector<8xf32>
    %61 = vector.multi_reduction <add>, %60, %cst_27 [1] : vector<8x32xf32> to vector<8xf32>
    %62 = vector.shape_cast %61 : vector<8xf32> to vector<8x1xf32>
    %cst_28 = arith.constant 3.125000e-02 : f32
    %63 = vector.broadcast %cst_28 : f32 to vector<8x1xf32>
    %64 = arith.mulf %62, %63 : vector<8x1xf32>
    %cst_29 = arith.constant 9.99999974E-6 : f32
    %65 = vector.broadcast %cst_29 : f32 to vector<8x1xf32>
    %66 = arith.addf %64, %65 : vector<8x1xf32>
    %67 = math.rsqrt %66 : vector<8x1xf32>
    %68 = vector.broadcast %67 : vector<8x1xf32> to vector<8x32xf32>
    %69 = arith.mulf %59, %68 : vector<8x32xf32>
    %70 = vector.broadcast %52 : vector<1x32xf32> to vector<8x32xf32>
    %71 = arith.mulf %69, %70 : vector<8x32xf32>
    %72 = vector.broadcast %53 : vector<1x32xf32> to vector<8x32xf32>
    %73 = arith.addf %71, %72 : vector<8x32xf32>
    %c0_30 = arith.constant 0 : index
    %c0_31 = arith.constant 0 : index
    %74 = vector.load %arg8[%c0_30, %c0_31] : memref<32x64xf32, #tpu.memory_space<vmem>>, vector<32x64xf32>
    %cst_32 = arith.constant dense<0.000000e+00> : vector<8x64xf32>
    %75 = tpu.matmul %73, %74, %cst_32 {dimension_numbers = #tpu.dot_dimension_numbers<[1], [0], [0], [1], [0, 0, 1, 1], [], []>} : vector<8x32xf32>, vector<32x64xf32>, vector<8x64xf32> -> vector<8x64xf32>
    %c0_33 = arith.constant 0 : index
    %c0_34 = arith.constant 0 : index
    %76 = vector.load %arg9[%c0_33, %c0_34] : memref<1x64xf32, #tpu.memory_space<vmem>>, vector<1x64xf32>
    %77 = vector.broadcast %76 : vector<1x64xf32> to vector<8x64xf32>
    %78 = arith.addf %75, %77 : vector<8x64xf32>
    %cst_35 = arith.constant 5.000000e-01 : f32
    %79 = vector.broadcast %cst_35 : f32 to vector<8x64xf32>
    %80 = arith.mulf %79, %78 : vector<8x64xf32>
    %cst_36 = arith.constant 0.707106769 : f32
    %81 = vector.broadcast %cst_36 : f32 to vector<8x64xf32>
    %82 = arith.mulf %78, %81 : vector<8x64xf32>
    %83 = math.erf %82 : vector<8x64xf32>
    %cst_37 = arith.constant 1.000000e+00 : f32
    %84 = vector.broadcast %cst_37 : f32 to vector<8x64xf32>
    %85 = arith.addf %84, %83 : vector<8x64xf32>
    %86 = arith.mulf %80, %85 : vector<8x64xf32>
    %c0_38 = arith.constant 0 : index
    %c0_39 = arith.constant 0 : index
    %87 = vector.load %arg10[%c0_38, %c0_39] : memref<64x32xf32, #tpu.memory_space<vmem>>, vector<64x32xf32>
    %cst_40 = arith.constant dense<0.000000e+00> : vector<8x32xf32>
    %88 = tpu.matmul %86, %87, %cst_40 {dimension_numbers = #tpu.dot_dimension_numbers<[1], [0], [0], [1], [0, 0, 1, 1], [], []>} : vector<8x64xf32>, vector<64x32xf32>, vector<8x32xf32> -> vector<8x32xf32>
    %c0_41 = arith.constant 0 : index
    %c0_42 = arith.constant 0 : index
    %89 = vector.load %arg11[%c0_41, %c0_42] : memref<1x32xf32, #tpu.memory_space<vmem>>, vector<1x32xf32>
    %90 = vector.broadcast %89 : vector<1x32xf32> to vector<8x32xf32>
    %91 = arith.addf %88, %90 : vector<8x32xf32>
    %92 = arith.addf %73, %91 : vector<8x32xf32>
    %c0_43 = arith.constant 0 : index
    %c0_44 = arith.constant 0 : index
    %93 = vector.load %arg12[%c0_43, %c0_44] : memref<1x32xf32, #tpu.memory_space<vmem>>, vector<1x32xf32>
    %c0_45 = arith.constant 0 : index
    %c0_46 = arith.constant 0 : index
    %94 = vector.load %arg13[%c0_45, %c0_46] : memref<1x32xf32, #tpu.memory_space<vmem>>, vector<1x32xf32>
    %cst_47 = arith.constant dense<0.000000e+00> : vector<8xf32>
    %95 = vector.multi_reduction <add>, %92, %cst_47 [1] : vector<8x32xf32> to vector<8xf32>
    %96 = vector.shape_cast %95 : vector<8xf32> to vector<8x1xf32>
    %cst_48 = arith.constant 3.125000e-02 : f32
    %97 = vector.broadcast %cst_48 : f32 to vector<8x1xf32>
    %98 = arith.mulf %96, %97 : vector<8x1xf32>
    %99 = vector.broadcast %98 : vector<8x1xf32> to vector<8x32xf32>
    %100 = arith.subf %92, %99 : vector<8x32xf32>
    %101 = arith.mulf %100, %100 : vector<8x32xf32>
    %cst_49 = arith.constant dense<0.000000e+00> : vector<8xf32>
    %102 = vector.multi_reduction <add>, %101, %cst_49 [1] : vector<8x32xf32> to vector<8xf32>
    %103 = vector.shape_cast %102 : vector<8xf32> to vector<8x1xf32>
    %cst_50 = arith.constant 3.125000e-02 : f32
    %104 = vector.broadcast %cst_50 : f32 to vector<8x1xf32>
    %105 = arith.mulf %103, %104 : vector<8x1xf32>
    %cst_51 = arith.constant 9.99999974E-6 : f32
    %106 = vector.broadcast %cst_51 : f32 to vector<8x1xf32>
    %107 = arith.addf %105, %106 : vector<8x1xf32>
    %108 = math.rsqrt %107 : vector<8x1xf32>
    %109 = vector.broadcast %108 : vector<8x1xf32> to vector<8x32xf32>
    %110 = arith.mulf %100, %109 : vector<8x32xf32>
    %111 = vector.broadcast %93 : vector<1x32xf32> to vector<8x32xf32>
    %112 = arith.mulf %110, %111 : vector<8x32xf32>
    %113 = vector.broadcast %94 : vector<1x32xf32> to vector<8x32xf32>
    %114 = arith.addf %112, %113 : vector<8x32xf32>
    %c0_52 = arith.constant 0 : index
    %c0_53 = arith.constant 0 : index
    %c0_54 = arith.constant 0 : index
    %115 = vector.load %arg14[%c0_52, %c0_53, %c0_54] : memref<1x8x32xf32, #tpu.memory_space<vmem>>, vector<1x8x32xf32>
    %116 = vector.shape_cast %115 : vector<1x8x32xf32> to vector<8x32xf32>
    %117 = vector.shape_cast %114 : vector<8x32xf32> to vector<1x8x32xf32>
    tpu.vector_store %arg14[%c0_52, %c0_53, %c0_54], %117 {strides = array<i32>} : memref<1x8x32xf32, #tpu.memory_space<vmem>>, vector<1x8x32xf32>,
    return
  }
  func.func @transform_0(%arg0: i32) -> (i32, i32, i32) {
    %c0_i32 = arith.constant 0 : i32
    %c0_i32_0 = arith.constant 0 : i32
    %c0_i32_1 = arith.constant 0 : i32
    return %arg0, %c0_i32, %c0_i32_0 : i32, i32, i32
  }
  func.func @transform_1(%arg0: i32) -> (i32, i32) {
    %c0_i32 = arith.constant 0 : i32
    %c0_i32_0 = arith.constant 0 : i32
    %c0_i32_1 = arith.constant 0 : i32
    return %c0_i32, %c0_i32_0 : i32, i32
  }
  func.func @transform_2(%arg0: i32) -> (i32, i32) {
    %c0_i32 = arith.constant 0 : i32
    %c0_i32_0 = arith.constant 0 : i32
    %c0_i32_1 = arith.constant 0 : i32
    return %c0_i32, %c0_i32_0 : i32, i32
  }
  func.func @transform_3(%arg0: i32) -> (i32, i32) {
    %c0_i32 = arith.constant 0 : i32
    %c0_i32_0 = arith.constant 0 : i32
    %c0_i32_1 = arith.constant 0 : i32
    return %c0_i32, %c0_i32_0 : i32, i32
  }
  func.func @transform_4(%arg0: i32) -> (i32, i32) {
    %c0_i32 = arith.constant 0 : i32
    %c0_i32_0 = arith.constant 0 : i32
    %c0_i32_1 = arith.constant 0 : i32
    return %c0_i32, %c0_i32_0 : i32, i32
  }
  func.func @transform_5(%arg0: i32) -> (i32, i32) {
    %c0_i32 = arith.constant 0 : i32
    %c0_i32_0 = arith.constant 0 : i32
    %c0_i32_1 = arith.constant 0 : i32
    return %c0_i32, %c0_i32_0 : i32, i32
  }
  func.func @transform_6(%arg0: i32) -> (i32, i32) {
    %c0_i32 = arith.constant 0 : i32
    %c0_i32_0 = arith.constant 0 : i32
    %c0_i32_1 = arith.constant 0 : i32
    return %c0_i32, %c0_i32_0 : i32, i32
  }
  func.func @transform_7(%arg0: i32) -> (i32, i32) {
    %c0_i32 = arith.constant 0 : i32
    %c0_i32_0 = arith.constant 0 : i32
    %c0_i32_1 = arith.constant 0 : i32
    return %c0_i32, %c0_i32_0 : i32, i32
  }
  func.func @transform_8(%arg0: i32) -> (i32, i32) {
    %c0_i32 = arith.constant 0 : i32
    %c0_i32_0 = arith.constant 0 : i32
    %c0_i32_1 = arith.constant 0 : i32
    return %c0_i32, %c0_i32_0 : i32, i32
  }
  func.func @transform_9(%arg0: i32) -> (i32, i32) {
    %c0_i32 = arith.constant 0 : i32
    %c0_i32_0 = arith.constant 0 : i32
    %c0_i32_1 = arith.constant 0 : i32
    return %c0_i32, %c0_i32_0 : i32, i32
  }
  func.func @transform_10(%arg0: i32) -> (i32, i32) {
    %c0_i32 = arith.constant 0 : i32
    %c0_i32_0 = arith.constant 0 : i32
    %c0_i32_1 = arith.constant 0 : i32
    return %c0_i32, %c0_i32_0 : i32, i32
  }
  func.func @transform_11(%arg0: i32) -> (i32, i32) {
    %c0_i32 = arith.constant 0 : i32
    %c0_i32_0 = arith.constant 0 : i32
    %c0_i32_1 = arith.constant 0 : i32
    return %c0_i32, %c0_i32_0 : i32, i32
  }
  func.func @transform_12(%arg0: i32) -> (i32, i32) {
    %c0_i32 = arith.constant 0 : i32
    %c0_i32_0 = arith.constant 0 : i32
    %c0_i32_1 = arith.constant 0 : i32
    return %c0_i32, %c0_i32_0 : i32, i32
  }
  func.func @transform_13(%arg0: i32) -> (i32, i32, i32) {
    %c0_i32 = arith.constant 0 : i32
    %c0_i32_0 = arith.constant 0 : i32
    %c0_i32_1 = arith.constant 0 : i32
    return %arg0, %c0_i32, %c0_i32_0 : i32, i32, i32
  }
}

</mosaic_0001>

<llo_original>
// kernel: tpu_custom_call.1
$region0: #{tpu_custom_call.1}
  #allocation0 [shape = 'u32[]', space=smem, size = 0x4, offset = 0x4, fixed_abs, tag = 'smem constant byte address 0x4 - core index']
  #allocation1 [shape = 'u32[144,128]{1,0:T(1,128)}', space=vmem, size = 0x12000, scoped, tag = 'internal scratch']
  %s0 = inlined_call_operand.hbm [shape: f32[2,8,32], index: 0, kind: input, shape index: {}]
  %s1 = inlined_call_operand.vmem [shape: f32[32,96], index: 1, kind: input, shape index: {}]
  %s2 = inlined_call_operand.vmem [shape: f32[1,96], index: 2, kind: input, shape index: {}]
  %s3 = inlined_call_operand.vmem [shape: f32[32,32], index: 3, kind: input, shape index: {}]
  %s4 = inlined_call_operand.vmem [shape: f32[1,32], index: 4, kind: input, shape index: {}]
  %s5 = inlined_call_operand.hbm [shape: f32[1,32], index: 5, kind: input, shape index: {}]
  %s6 = inlined_call_operand.hbm [shape: f32[1,32], index: 6, kind: input, shape index: {}]
  %s7 = inlined_call_operand.vmem [shape: f32[32,64], index: 7, kind: input, shape index: {}]
  %s8 = inlined_call_operand.hbm [shape: f32[1,64], index: 8, kind: input, shape index: {}]
  %s9 = inlined_call_operand.vmem [shape: f32[64,32], index: 9, kind: input, shape index: {}]
  %s10 = inlined_call_operand.vmem [shape: f32[1,32], index: 10, kind: input, shape index: {}]
  %s11 = inlined_call_operand.vmem [shape: f32[1,32], index: 11, kind: input, shape index: {}]
  %s12 = inlined_call_operand.vmem [shape: f32[1,32], index: 12, kind: input, shape index: {}]
  %s13 = inlined_call_operand.hbm [shape: f32[2,8,32], index: 13, kind: output, shape index: {}]
  %s14 = sld [smem:[#allocation0]]
  $region101: #{tpu_custom_call.1} parent=0
    _
  %s16 = ssub.s32 1, %s14
  %s17 = scalar_select 0, %s16, %s14
  $region1: #{tpu_custom_call.1} parent=0
    #allocation2 [shape = 'u8[8192]{0}', space=vmem, size = 0x2000, scoped, tag = 'input window, operand 0']
    #allocation3 [shape = 's32[2]{0}', space=sflag, size = 0x8, scoped, tag = 'scoped memory for tpu_custom_call.1']
    #allocation4 [shape = 's32[2]{0}', space=sflag, size = 0x8, scoped, tag = 'scoped memory for tpu_custom_call.1']
    #allocation5 [shape = 'u8[512]{0}', space=vmem, size = 0x400, scoped, tag = 'input window, operand 5, single buffered']
    #allocation6 [shape = 's32[1]{0}', space=sflag, size = 0x4, scoped, tag = 'scoped memory for tpu_custom_call.1']
    #allocation7 [shape = 'u8[512]{0}', space=vmem, size = 0x400, scoped, tag = 'input window, operand 6, single buffered']
    #allocation8 [shape = 'u8[512]{0}', space=vmem, size = 0x400, scoped, tag = 'input window, operand 8, single buffered']
    #allocation9 [shape = 's32[1]{0}', space=sflag, size = 0x4, scoped, tag = 'scoped memory for tpu_custom_call.1']
    #allocation10 [shape = 'u8[8192]{0}', space=vmem, size = 0x2000, scoped, tag = 'output window, operand 0']
    %18 = vsyncpa [#allocation3], 0
    %s19 = scalar_lea.sflag [#allocation3], 1
    %20 = vsyncpa %s19, 0
    %21 = vsyncpa [#allocation6], 0
    %22 = vsyncpa [#allocation9], 0
    %23 = vsyncpa [#allocation4], 0
    %s24 = scalar_lea.sflag [#allocation4], 1
    %25 = vsyncpa %s24, 0
    loop: start=0, step=1, limit=4
    $region2: #{tpu_custom_call.1} parent=1 // loop_pre_header
      _
    $region3: #{tpu_custom_call.1} parent=1 // loop_header
      %s27 = sphi 0, %s31
      %p28 = scmp.ge.s32.totalorder %s27, 4
      %s37 = sphi 0, %s39
      %s40 = sphi 0, %s37
      %s41 = sphi 0, %s40
      %s57 = sphi 0, %s41
      %s61 = sphi 0, %s61
      %s63 = sphi 0, %s61
      %s64 = sphi 0, %s63
      %s78 = sphi 0, %s64
      %s82 = sphi 0, %s82
      %s84 = sphi 0, %s82
      %s85 = sphi 0, %s84
      %s99 = sphi 0, %s85
      %s103 = sphi 0, %s103
      %s105 = sphi 0, %s103
      %s106 = sphi 0, %s105
      %s120 = sphi 0, %s106
      %s124 = sphi 0, %s124
      %s126 = sphi 0, %s124
      %s127 = sphi 0, %s126
      %s141 = sphi 0, %s127
      %s145 = sphi 0, %s145
      %s147 = sphi 0, %s145
      %s148 = sphi 0, %s147
      %s162 = sphi 0, %s148
      %s166 = sphi 0, %s166
      %s168 = sphi 0, %s166
      %s169 = sphi 0, %s168
      %s183 = sphi 0, %s169
      %s187 = sphi 0, %s187
      %s189 = sphi 0, %s187
      %s190 = sphi 0, %s189
      %s204 = sphi 0, %s190
      %s208 = sphi 0, %s208
      %s210 = sphi 0, %s208
      %s211 = sphi 0, %s210
      %s225 = sphi 0, %s211
      %s229 = sphi 0, %s229
      %s231 = sphi 0, %s229
      %s232 = sphi 0, %s231
      %s246 = sphi 0, %s232
      %s250 = sphi 0, %s250
      %s252 = sphi 0, %s250
      %s253 = sphi 0, %s252
      %s267 = sphi 0, %s253
      %s271 = sphi 0, %s271
      %s273 = sphi 0, %s271
      %s274 = sphi 0, %s273
      %s288 = sphi 0, %s274
      %s292 = sphi 0, %s292
      %s294 = sphi 0, %s292
      %s295 = sphi 0, %s294
      %s309 = sphi 0, %s295
      %s315 = sphi 0, %s317
      %s318 = sphi 0, %s315
      %s319 = sphi 0, %s318
      %s335 = sphi 0, %s319
    $region4: #{tpu_custom_call.1} parent=1 // loop_header_branch
      %30 = sbr.rel (%p28) target = $region8
    $region5: #{tpu_custom_call.1} parent=1 // loop_body
      %s32 = ssub.s32 %s27, 1
      %s33 = ssub.s32 %s27, 2
      %s34 = sadd.s32 %s27, 1
      %s35 = ssub.s32 %s27, %s34
      %p36 = scmp.eq.s32.totalorder %s35, 0
      %s38 = sadd.s32 %s37, 1
      %s39 = scalar_select %p36, %s37, %s38
      %p42 = pneg %p36
      %p43 = scmp.eq.s32.totalorder %s27, 1
      %p44 = por %p42, %p43
      %p45 = scmp.ne.s32.totalorder %s37, %s40
      %p46 = scmp.eq.s32.totalorder %s27, 0
      %p47 = por %p45, %p46
      %p48 = scmp.ne.s32.totalorder %s37, %s40
      %p49 = scmp.eq.s32.totalorder %s32, 1
      %p50 = por %p48, %p49
      %p51 = scmp.ne.s32.totalorder %s40, %s41
      %p52 = scmp.eq.s32.totalorder %s32, 0
      %p53 = por %p51, %p52
      %p54 = scmp.ne.s32.totalorder %s40, %s41
      %p55 = scmp.eq.s32.totalorder %s33, 1
      %p56 = por %p54, %p55
      %p58 = scmp.ne.s32.totalorder %s41, %s57
      %p59 = scmp.eq.s32.totalorder %s33, 0
      %p60 = por %p58, %p59
      %s62 = sadd.s32 %s61, 1
      %p65 = scmp.eq.s32.totalorder %s27, 1
      %p66 = scmp.ne.s32.totalorder %s61, %s63
      %p67 = scmp.eq.s32.totalorder %s27, 0
      %p68 = por %p66, %p67
      %p69 = scmp.ne.s32.totalorder %s61, %s63
      %p70 = scmp.eq.s32.totalorder %s32, 1
      %p71 = por %p69, %p70
      %p72 = scmp.ne.s32.totalorder %s63, %s64
      %p73 = scmp.eq.s32.totalorder %s32, 0
      %p74 = por %p72, %p73
      %p75 = scmp.ne.s32.totalorder %s63, %s64
      %p76 = scmp.eq.s32.totalorder %s33, 1
      %p77 = por %p75, %p76
      %p79 = scmp.ne.s32.totalorder %s64, %s78
      %p80 = scmp.eq.s32.totalorder %s33, 0
      %p81 = por %p79, %p80
      %s83 = sadd.s32 %s82, 1
      %p86 = scmp.eq.s32.totalorder %s27, 1
      %p87 = scmp.ne.s32.totalorder %s82, %s84
      %p88 = scmp.eq.s32.totalorder %s27, 0
      %p89 = por %p87, %p88
      %p90 = scmp.ne.s32.totalorder %s82, %s84
      %p91 = scmp.eq.s32.totalorder %s32, 1
      %p92 = por %p90, %p91
      %p93 = scmp.ne.s32.totalorder %s84, %s85
      %p94 = scmp.eq.s32.totalorder %s32, 0
      %p95 = por %p93, %p94
      %p96 = scmp.ne.s32.totalorder %s84, %s85
      %p97 = scmp.eq.s32.totalorder %s33, 1
      %p98 = por %p96, %p97
      %p100 = scmp.ne.s32.totalorder %s85, %s99
      %p101 = scmp.eq.s32.totalorder %s33, 0
      %p102 = por %p100, %p101
      %s104 = sadd.s32 %s103, 1
      %p107 = scmp.eq.s32.totalorder %s27, 1
      %p108 = scmp.ne.s32.totalorder %s103, %s105
      %p109 = scmp.eq.s32.totalorder %s27, 0
      %p110 = por %p108, %p109
      %p111 = scmp.ne.s32.totalorder %s103, %s105
      %p112 = scmp.eq.s32.totalorder %s32, 1
      %p113 = por %p111, %p112
      %p114 = scmp.ne.s32.totalorder %s105, %s106
      %p115 = scmp.eq.s32.totalorder %s32, 0
      %p116 = por %p114, %p115
      %p117 = scmp.ne.s32.totalorder %s105, %s106
      %p118 = scmp.eq.s32.totalorder %s33, 1
      %p119 = por %p117, %p118
      %p121 = scmp.ne.s32.totalorder %s106, %s120
      %p122 = scmp.eq.s32.totalorder %s33, 0
      %p123 = por %p121, %p122
      %s125 = sadd.s32 %s124, 1
      %p128 = scmp.eq.s32.totalorder %s27, 1
      %p129 = scmp.ne.s32.totalorder %s124, %s126
      %p130 = scmp.eq.s32.totalorder %s27, 0
      %p131 = por %p129, %p130
      %p132 = scmp.ne.s32.totalorder %s124, %s126
      %p133 = scmp.eq.s32.totalorder %s32, 1
      %p134 = por %p132, %p133
      %p135 = scmp.ne.s32.totalorder %s126, %s127
      %p136 = scmp.eq.s32.totalorder %s32, 0
      %p137 = por %p135, %p136
      %p138 = scmp.ne.s32.totalorder %s126, %s127
      %p139 = scmp.eq.s32.totalorder %s33, 1
      %p140 = por %p138, %p139
      %p142 = scmp.ne.s32.totalorder %s127, %s141
      %p143 = scmp.eq.s32.totalorder %s33, 0
      %p144 = por %p142, %p143
      %s146 = sadd.s32 %s145, 1
      %p149 = scmp.eq.s32.totalorder %s27, 1
      %p150 = scmp.ne.s32.totalorder %s145, %s147
      %p151 = scmp.eq.s32.totalorder %s27, 0
      %p152 = por %p150, %p151
      %p153 = scmp.ne.s32.totalorder %s145, %s147
      %p154 = scmp.eq.s32.totalorder %s32, 1
      %p155 = por %p153, %p154
      %p156 = scmp.ne.s32.totalorder %s147, %s148
      %p157 = scmp.eq.s32.totalorder %s32, 0
      %p158 = por %p156, %p157
      %p159 = scmp.ne.s32.totalorder %s147, %s148
      %p160 = scmp.eq.s32.totalorder %s33, 1
      %p161 = por %p159, %p160
      %p163 = scmp.ne.s32.totalorder %s148, %s162
      %p164 = scmp.eq.s32.totalorder %s33, 0
      %p165 = por %p163, %p164
      %s167 = sadd.s32 %s166, 1
      %p170 = scmp.eq.s32.totalorder %s27, 1
      %p171 = scmp.ne.s32.totalorder %s166, %s168
      %p172 = scmp.eq.s32.totalorder %s27, 0
      %p173 = por %p171, %p172
      %p174 = scmp.ne.s32.totalorder %s166, %s168
      %p175 = scmp.eq.s32.totalorder %s32, 1
      %p176 = por %p174, %p175
      %p177 = scmp.ne.s32.totalorder %s168, %s169
      %p178 = scmp.eq.s32.totalorder %s32, 0
      %p179 = por %p177, %p178
      %p180 = scmp.ne.s32.totalorder %s168, %s169
      %p181 = scmp.eq.s32.totalorder %s33, 1
      %p182 = por %p180, %p181
      %p184 = scmp.ne.s32.totalorder %s169, %s183
      %p185 = scmp.eq.s32.totalorder %s33, 0
      %p186 = por %p184, %p185
      %s188 = sadd.s32 %s187, 1
      %p191 = scmp.eq.s32.totalorder %s27, 1
      %p192 = scmp.ne.s32.totalorder %s187, %s189
      %p193 = scmp.eq.s32.totalorder %s27, 0
      %p194 = por %p192, %p193
      %p195 = scmp.ne.s32.totalorder %s187, %s189
      %p196 = scmp.eq.s32.totalorder %s32, 1
      %p197 = por %p195, %p196
      %p198 = scmp.ne.s32.totalorder %s189, %s190
      %p199 = scmp.eq.s32.totalorder %s32, 0
      %p200 = por %p198, %p199
      %p201 = scmp.ne.s32.totalorder %s189, %s190
      %p202 = scmp.eq.s32.totalorder %s33, 1
      %p203 = por %p201, %p202
      %p205 = scmp.ne.s32.totalorder %s190, %s204
      %p206 = scmp.eq.s32.totalorder %s33, 0
      %p207 = por %p205, %p206
      %s209 = sadd.s32 %s208, 1
      %p212 = scmp.eq.s32.totalorder %s27, 1
      %p213 = scmp.ne.s32.totalorder %s208, %s210
      %p214 = scmp.eq.s32.totalorder %s27, 0
      %p215 = por %p213, %p214
      %p216 = scmp.ne.s32.totalorder %s208, %s210
      %p217 = scmp.eq.s32.totalorder %s32, 1
      %p218 = por %p216, %p217
      %p219 = scmp.ne.s32.totalorder %s210, %s211
      %p220 = scmp.eq.s32.totalorder %s32, 0
      %p221 = por %p219, %p220
      %p222 = scmp.ne.s32.totalorder %s210, %s211
      %p223 = scmp.eq.s32.totalorder %s33, 1
      %p224 = por %p222, %p223
      %p226 = scmp.ne.s32.totalorder %s211, %s225
      %p227 = scmp.eq.s32.totalorder %s33, 0
      %p228 = por %p226, %p227
      %s230 = sadd.s32 %s229, 1
      %p233 = scmp.eq.s32.totalorder %s27, 1
      %p234 = scmp.ne.s32.totalorder %s229, %s231
      %p235 = scmp.eq.s32.totalorder %s27, 0
      %p236 = por %p234, %p235
      %p237 = scmp.ne.s32.totalorder %s229, %s231
      %p238 = scmp.eq.s32.totalorder %s32, 1
      %p239 = por %p237, %p238
      %p240 = scmp.ne.s32.totalorder %s231, %s232
      %p241 = scmp.eq.s32.totalorder %s32, 0
      %p242 = por %p240, %p241
      %p243 = scmp.ne.s32.totalorder %s231, %s232
      %p244 = scmp.eq.s32.totalorder %s33, 1
      %p245 = por %p243, %p244
      %p247 = scmp.ne.s32.totalorder %s232, %s246
      %p248 = scmp.eq.s32.totalorder %s33, 0
      %p249 = por %p247, %p248
      %s251 = sadd.s32 %s250, 1
      %p254 = scmp.eq.s32.totalorder %s27, 1
      %p255 = scmp.ne.s32.totalorder %s250, %s252
      %p256 = scmp.eq.s32.totalorder %s27, 0
      %p257 = por %p255, %p256
      %p258 = scmp.ne.s32.totalorder %s250, %s252
      %p259 = scmp.eq.s32.totalorder %s32, 1
      %p260 = por %p258, %p259
      %p261 = scmp.ne.s32.totalorder %s252, %s253
      %p262 = scmp.eq.s32.totalorder %s32, 0
      %p263 = por %p261, %p262
      %p264 = scmp.ne.s32.totalorder %s252, %s253
      %p265 = scmp.eq.s32.totalorder %s33, 1
      %p266 = por %p264, %p265
      %p268 = scmp.ne.s32.totalorder %s253, %s267
      %p269 = scmp.eq.s32.totalorder %s33, 0
      %p270 = por %p268, %p269
      %s272 = sadd.s32 %s271, 1
      %p275 = scmp.eq.s32.totalorder %s27, 1
      %p276 = scmp.ne.s32.totalorder %s271, %s273
      %p277 = scmp.eq.s32.totalorder %s27, 0
      %p278 = por %p276, %p277
      %p279 = scmp.ne.s32.totalorder %s271, %s273
      %p280 = scmp.eq.s32.totalorder %s32, 1
      %p281 = por %p279, %p280
      %p282 = scmp.ne.s32.totalorder %s273, %s274
      %p283 = scmp.eq.s32.totalorder %s32, 0
      %p284 = por %p282, %p283
      %p285 = scmp.ne.s32.totalorder %s273, %s274
      %p286 = scmp.eq.s32.totalorder %s33, 1
      %p287 = por %p285, %p286
      %p289 = scmp.ne.s32.totalorder %s274, %s288
      %p290 = scmp.eq.s32.totalorder %s33, 0
      %p291 = por %p289, %p290
      %s293 = sadd.s32 %s292, 1
      %p296 = scmp.eq.s32.totalorder %s27, 1
      %p297 = scmp.ne.s32.totalorder %s292, %s294
      %p298 = scmp.eq.s32.totalorder %s27, 0
      %p299 = por %p297, %p298
      %p300 = scmp.ne.s32.totalorder %s292, %s294
      %p301 = scmp.eq.s32.totalorder %s32, 1
      %p302 = por %p300, %p301
      %p303 = scmp.ne.s32.totalorder %s294, %s295
      %p304 = scmp.eq.s32.totalorder %s32, 0
      %p305 = por %p303, %p304
      %p306 = scmp.ne.s32.totalorder %s294, %s295
      %p307 = scmp.eq.s32.totalorder %s33, 1
      %p308 = por %p306, %p307
      %p310 = scmp.ne.s32.totalorder %s295, %s309
      %p311 = scmp.eq.s32.totalorder %s33, 0
      %p312 = por %p310, %p311
      %s313 = ssub.s32 %s27, %s34
      %p314 = scmp.eq.s32.totalorder %s313, 0
      %s316 = sadd.s32 %s315, 1
      %s317 = scalar_select %p314, %s315, %s316
      %p320 = pneg %p314
      %p321 = scmp.eq.s32.totalorder %s27, 1
      %p322 = por %p320, %p321
      %p323 = scmp.ne.s32.totalorder %s315, %s318
      %p324 = scmp.eq.s32.totalorder %s27, 0
      %p325 = por %p323, %p324
      %p326 = scmp.ne.s32.totalorder %s315, %s318
      %p327 = scmp.eq.s32.totalorder %s32, 1
      %p328 = por %p326, %p327
      %p329 = scmp.ne.s32.totalorder %s318, %s319
      %p330 = scmp.eq.s32.totalorder %s32, 0
      %p331 = por %p329, %p330
      %p332 = scmp.ne.s32.totalorder %s318, %s319
      %p333 = scmp.eq.s32.totalorder %s33, 1
      %p334 = por %p332, %p333
      %p336 = scmp.ne.s32.totalorder %s319, %s335
      %p337 = scmp.eq.s32.totalorder %s33, 0
      %p338 = por %p336, %p337
      %p339 = scmp.le.s32.totalorder 1, %s27
      %p340 = scmp.lt.s32.totalorder %s27, 3
      %p341 = pnand %p339, %p340
      %p342 = pneg %p341
      // Predicated region
      $region9: #{tpu_custom_call.1} parent=5 // pred_check
        _
      $region10: #{tpu_custom_call.1} parent=5 // pred_check_branch
        %344 = sbr.rel (%p341) target = $region12
      $region11: #{tpu_custom_call.1} parent=5 // pred_region
        %s345 = ssub.s32 %s27, 1
        // Predicated region
        $region13: #{tpu_custom_call.1} parent=11 // pred_check
          %p346 = pneg %p74
        $region14: #{tpu_custom_call.1} parent=11 // pred_check_branch
          %348 = sbr.rel (%p346) target = $region16
        $region15: #{tpu_custom_call.1} parent=11 // pred_region
          _
        $region16: #{tpu_custom_call.1} parent=11 // pred_fallthru
          _
        // Predicated region
        $region17: #{tpu_custom_call.1} parent=11 // pred_check
          %p349 = pneg %p95
        $region18: #{tpu_custom_call.1} parent=11 // pred_check_branch
          %351 = sbr.rel (%p349) target = $region20
        $region19: #{tpu_custom_call.1} parent=11 // pred_region
          _
        $region20: #{tpu_custom_call.1} parent=11 // pred_fallthru
          _
        // Predicated region
        $region21: #{tpu_custom_call.1} parent=11 // pred_check
          %p352 = pneg %p116
        $region22: #{tpu_custom_call.1} parent=11 // pred_check_branch
          %354 = sbr.rel (%p352) target = $region24
        $region23: #{tpu_custom_call.1} parent=11 // pred_region
          _
        $region24: #{tpu_custom_call.1} parent=11 // pred_fallthru
          _
        // Predicated region
        $region25: #{tpu_custom_call.1} parent=11 // pred_check
          %p355 = pneg %p137
        $region26: #{tpu_custom_call.1} parent=11 // pred_check_branch
          %357 = sbr.rel (%p355) target = $region28
        $region27: #{tpu_custom_call.1} parent=11 // pred_region
          _
        $region28: #{tpu_custom_call.1} parent=11 // pred_fallthru
          _
        // Predicated region
        $region29: #{tpu_custom_call.1} parent=11 // pred_check
          %p358 = pneg %p158
        $region30: #{tpu_custom_call.1} parent=11 // pred_check_branch
          %360 = sbr.rel (%p358) target = $region32
        $region31: #{tpu_custom_call.1} parent=11 // pred_region
          %s362 = ssub.s32 16, 16
          %363 = vsyncadd [#allocation6], %s362
          %s365 = sshll.u32 [#allocation5], 4
          %s366 = int_to_ptr.vmem [resolvable:$true] %s365
          %368 = dma.hbm_to_vmem [thread:$0]  %s5, 16, %s366, [#allocation6]
        $region32: #{tpu_custom_call.1} parent=11 // pred_fallthru
          _
        // Predicated region
        $region33: #{tpu_custom_call.1} parent=11 // pred_check
          %p369 = pneg %p179
        $region34: #{tpu_custom_call.1} parent=11 // pred_check_branch
          %371 = sbr.rel (%p369) target = $region36
        $region35: #{tpu_custom_call.1} parent=11 // pred_region
          %s373 = ssub.s32 16, 16
          %374 = vsyncadd [#allocation6], %s373
          %s376 = sshll.u32 [#allocation7], 4
          %s377 = int_to_ptr.vmem [resolvable:$true] %s376
          %379 = dma.hbm_to_vmem [thread:$0]  %s6, 16, %s377, [#allocation6]
        $region36: #{tpu_custom_call.1} parent=11 // pred_fallthru
          _
        // Predicated region
        $region37: #{tpu_custom_call.1} parent=11 // pred_check
          %p380 = pneg %p200
        $region38: #{tpu_custom_call.1} parent=11 // pred_check_branch
          %382 = sbr.rel (%p380) target = $region40
        $region39: #{tpu_custom_call.1} parent=11 // pred_region
          _
        $region40: #{tpu_custom_call.1} parent=11 // pred_fallthru
          _
        // Predicated region
        $region41: #{tpu_custom_call.1} parent=11 // pred_check
          %p383 = pneg %p221
        $region42: #{tpu_custom_call.1} parent=11 // pred_check_branch
          %385 = sbr.rel (%p383) target = $region44
        $region43: #{tpu_custom_call.1} parent=11 // pred_region
          %s387 = ssub.s32 16, 16
          %388 = vsyncadd [#allocation9], %s387
          %s390 = sshll.u32 [#allocation8], 4
          %s391 = int_to_ptr.vmem [resolvable:$true] %s390
          %393 = dma.hbm_to_vmem [thread:$0]  %s8, 16, %s391, [#allocation9]
        $region44: #{tpu_custom_call.1} parent=11 // pred_fallthru
          _
        // Predicated region
        $region45: #{tpu_custom_call.1} parent=11 // pred_check
          %p394 = pneg %p242
        $region46: #{tpu_custom_call.1} parent=11 // pred_check_branch
          %396 = sbr.rel (%p394) target = $region48
        $region47: #{tpu_custom_call.1} parent=11 // pred_region
          _
        $region48: #{tpu_custom_call.1} parent=11 // pred_fallthru
          _
        // Predicated region
        $region49: #{tpu_custom_call.1} parent=11 // pred_check
          %p397 = pneg %p263
        $region50: #{tpu_custom_call.1} parent=11 // pred_check_branch
          %399 = sbr.rel (%p397) target = $region52
        $region51: #{tpu_custom_call.1} parent=11 // pred_region
          _
        $region52: #{tpu_custom_call.1} parent=11 // pred_fallthru
          _
        // Predicated region
        $region53: #{tpu_custom_call.1} parent=11 // pred_check
          %p400 = pneg %p284
        $region54: #{tpu_custom_call.1} parent=11 // pred_check_branch
          %402 = sbr.rel (%p400) target = $region56
        $region55: #{tpu_custom_call.1} parent=11 // pred_region
          _
        $region56: #{tpu_custom_call.1} parent=11 // pred_fallthru
          _
        // Predicated region
        $region57: #{tpu_custom_call.1} parent=11 // pred_check
          %p403 = pneg %p305
        $region58: #{tpu_custom_call.1} parent=11 // pred_check_branch
          %405 = sbr.rel (%p403) target = $region60
        $region59: #{tpu_custom_call.1} parent=11 // pred_region
          _
        $region60: #{tpu_custom_call.1} parent=11 // pred_fallthru
          _
      $region12: #{tpu_custom_call.1} parent=5 // pred_fallthru
        _
      %p406 = scmp.lt.s32.totalorder %s27, 2
      // Predicated region
      $region61: #{tpu_custom_call.1} parent=5 // pred_check
        %p407 = pneg %p406
      $region62: #{tpu_custom_call.1} parent=5 // pred_check_branch
        %409 = sbr.rel (%p407) target = $region64
      $region63: #{tpu_custom_call.1} parent=5 // pred_region
        // Predicated region
        $region65: #{tpu_custom_call.1} parent=63 // pred_check
          %p410 = pneg %p47
        $region66: #{tpu_custom_call.1} parent=63 // pred_check_branch
          %412 = sbr.rel (%p410) target = $region68
        $region67: #{tpu_custom_call.1} parent=63 // pred_region
          %s413 = sand.u32 %s37, 1
          %s414 = scalar_lea.sflag [#allocation3], %s413
          %s415 = sand.u32 %s37, 1
          %s416 = smul.addr %s415, 8
          %s417 = scalar_lea.vmem [#allocation2], %s416
          %s419 = ssub.s32 128, 128
          %420 = vsyncadd %s414, %s419
          %s421 = smul.addr %s27, 128
          %s422 = scalar_lea.hbm %s0, %s421
          %s424 = sshll.u32 %s417, 4
          %s425 = int_to_ptr.vmem [resolvable:$true] %s424
          %427 = dma.hbm_to_vmem [thread:$0]  %s422, 128, %s425, %s414
        $region68: #{tpu_custom_call.1} parent=63 // pred_fallthru
          _
      $region64: #{tpu_custom_call.1} parent=5 // pred_fallthru
        _
      %p428 = scmp.le.s32.totalorder 1, %s27
      %p429 = scmp.lt.s32.totalorder %s27, 3
      %p430 = pnand %p428, %p429
      %p431 = pneg %p430
      // Predicated region
      $region69: #{tpu_custom_call.1} parent=5 // pred_check
        _
      $region70: #{tpu_custom_call.1} parent=5 // pred_check_branch
        %433 = sbr.rel (%p430) target = $region72
      $region71: #{tpu_custom_call.1} parent=5 // pred_region
        %s434 = ssub.s32 %s27, 1
        %s435 = sand.u32 %s40, 1
        %s436 = scalar_lea.sflag [#allocation3], %s435
        %s437 = sand.u32 %s40, 1
        %s438 = smul.addr %s437, 8
        %s439 = scalar_lea.vmem [#allocation2], %s438
        // Predicated region
        $region73: #{tpu_custom_call.1} parent=71 // pred_check
          %p440 = pneg %p53
        $region74: #{tpu_custom_call.1} parent=71 // pred_check_branch
          %442 = sbr.rel (%p440) target = $region76
        $region75: #{tpu_custom_call.1} parent=71 // pred_region
          %443 = dma.done %s436, 128
        $region76: #{tpu_custom_call.1} parent=71 // pred_fallthru
          _
        // Predicated region
        $region77: #{tpu_custom_call.1} parent=71 // pred_check
          %p444 = pneg %p158
        $region78: #{tpu_custom_call.1} parent=71 // pred_check_branch
          %446 = sbr.rel (%p444) target = $region80
        $region79: #{tpu_custom_call.1} parent=71 // pred_region
          %447 = dma.done [#allocation6], 16
        $region80: #{tpu_custom_call.1} parent=71 // pred_fallthru
          _
        // Predicated region
        $region81: #{tpu_custom_call.1} parent=71 // pred_check
          %p448 = pneg %p179
        $region82: #{tpu_custom_call.1} parent=71 // pred_check_branch
          %450 = sbr.rel (%p448) target = $region84
        $region83: #{tpu_custom_call.1} parent=71 // pred_region
          %451 = dma.done [#allocation6], 16
        $region84: #{tpu_custom_call.1} parent=71 // pred_fallthru
          _
        // Predicated region
        $region85: #{tpu_custom_call.1} parent=71 // pred_check
          %p452 = pneg %p221
        $region86: #{tpu_custom_call.1} parent=71 // pred_check_branch
          %454 = sbr.rel (%p452) target = $region88
        $region87: #{tpu_custom_call.1} parent=71 // pred_region
          %455 = dma.done [#allocation9], 16
        $region88: #{tpu_custom_call.1} parent=71 // pred_fallthru
          _
        %s456 = sand.u32 %s40, 1
        %s457 = scalar_lea.sflag [#allocation3], %s456
        %s458 = sand.u32 %s40, 1
        %s459 = smul.addr %s458, 8
        %s460 = scalar_lea.vmem [#allocation2], %s459
        %p461 = pneg %p53
        %p462 = pneg %p50
        %p463 = pneg %p74
        %p464 = pneg %p71
        %p465 = pneg %p95
        %p466 = pneg %p92
        %p467 = pneg %p116
        %p468 = pneg %p113
        %p469 = pneg %p137
        %p470 = pneg %p134
        %p471 = pneg %p158
        %p472 = pneg %p155
        %p473 = pneg %p179
        %p474 = pneg %p176
        %p475 = pneg %p200
        %p476 = pneg %p197
        %p477 = pneg %p221
        %p478 = pneg %p218
        %p479 = pneg %p242
        %p480 = pneg %p239
        %p481 = pneg %p263
        %p482 = pneg %p260
        %p483 = pneg %p284
        %p484 = pneg %p281
        %p485 = pneg %p305
        %p486 = pneg %p302
        %p487 = pneg %p331
        %p488 = pneg %p328
        %s489 = sand.u32 %s318, 1
        %s490 = scalar_lea.sflag [#allocation4], %s489
        %s491 = sand.u32 %s318, 1
        %s492 = smul.addr %s491, 8
        %s493 = scalar_lea.vmem [#allocation10], %s492
        %v494 = vld [vmem:[%s439] sm:$0xff]
        %v495 = vld [vmem:[%s1] sm:$0xff]
        %v496 = vld [vmem:[%s1 + $0x8] sm:$0xff]
        %v497 = vld [vmem:[%s1 + $0x10] sm:$0xff]
        %v498 = vld [vmem:[%s1 + $0x18] sm:$0xff]
        %v499 = vld [vmem:[%s2] sm:$0x1]
        %v501 = vlaneseq
        %v502 = vshrl.u32 %v501, 7
        %v503 = vsub.s32 0, %v502
        %v504 = vrot.slane %v499, %v503
        %vm506 = vcmask 261120
        %v508 = vsel %vm506, %v494, 0
        %510 = vmatprep.subr.mxu0 0.0
        %511 = vmatpush1.msra.mxu0 %v495
        %512 = vmatprep.subr.mxu0 0.0
        %513 = vmatpush1.msra.mxu0 %v496
        %514 = vmatprep.subr.mxu0 0.0
        %515 = vmatpush1.msra.mxu0 %v497
        %516 = vmatprep.subr.mxu0 0.0
        %517 = vmatpush1.msra.mxu0 %v498
        %518 = vmatprep.subr.mxu0 0.0
        %519 = vmatpush1.msra.mxu0 0.0
        %520 = vmatprep.subr.mxu0 0.0
        %521 = vmatpush1.msra.mxu0 0.0
        %522 = vmatprep.subr.mxu0 0.0
        %523 = vmatpush1.msra.mxu0 0.0
        %524 = vmatprep.subr.mxu0 0.0
        %525 = vmatpush1.msra.mxu0 0.0
        %526 = vmatprep.subr.mxu0 0.0
        %527 = vmatpush1.msra.mxu0 0.0
        %528 = vmatprep.subr.mxu0 0.0
        %529 = vmatpush1.msra.mxu0 0.0
        %530 = vmatprep.subr.mxu0 0.0
        %531 = vmatpush1.msra.mxu0 0.0
        %532 = vmatprep.subr.mxu0 0.0
        %533 = vmatpush1.msra.mxu0 0.0
        %534 = vmatprep.subr.mxu0 0.0
        %535 = vmatpush1.msra.mxu0 0.0
        %536 = vmatprep.subr.mxu0 0.0
        %537 = vmatpush1.msra.mxu0 0.0
        %538 = vmatprep.subr.mxu0 0.0
        %539 = vmatpush1.msra.mxu0 0.0
        %540 = vmatprep.subr.mxu0 0.0
        %541 = vmatpush1.msra.mxu0 0.0
        %542 = vmatprep.subr.mxu0 0.0
        %543 = vmatpush1.msra.mxu0 0.0
        %544 = vmatprep.subr.mxu0 0.0
        %545 = vmatpush1.msra.mxu0 0.0
        %546 = vmatprep.subr.mxu0 0.0
        %547 = vmatpush1.msra.mxu0 0.0
        %548 = vmatprep.subr.mxu0 0.0
        %549 = vmatpush1.msra.mxu0 0.0
        %550 = vmatprep.subr.mxu0 0.0
        %551 = vmatpush1.msra.mxu0 0.0
        %552 = vmatprep.subr.mxu0 0.0
        %553 = vmatpush1.msra.mxu0 0.0
        %554 = vmatprep.subr.mxu0 0.0
        %555 = vmatpush1.msra.mxu0 0.0
        %556 = vmatprep.subr.mxu0 0.0
        %557 = vmatpush1.msra.mxu0 0.0
        %558 = vmatprep.subr.mxu0 0.0
        %559 = vmatpush1.msra.mxu0 0.0
        %560 = vmatprep.subr.mxu0 0.0
        %561 = vmatpush1.msra.mxu0 0.0
        %562 = vmatprep.subr.mxu0 0.0
        %563 = vmatpush1.msra.mxu0 0.0
        %564 = vmatprep.subr.mxu0 0.0
        %565 = vmatpush1.msra.mxu0 0.0
        %566 = vmatprep.subr.mxu0 0.0
        %567 = vmatpush1.msra.mxu0 0.0
        %568 = vmatprep.subr.mxu0 0.0
        %569 = vmatpush1.msra.mxu0 0.0
        %570 = vmatprep.subr.mxu0 0.0
        %571 = vmatpush1.msra.mxu0 0.0
        %572 = vmatprep.subr.mxu0 0.0
        %573 = vmatpush1.msra.mxu0 0.0
        %574 = vmatprep.mubr.f32.mxu0 0.0
        %575 = vmatmul.mubr.f32.gmra.mrb[0].mxu0 %v508
        %v576 = vpop.f32.mrb[0].mxu0
        %v577 = vadd.f32 %v504, %v576
        %v578 = vpop.f32.mrb[0].mxu0
        %579 = vdwg.mxu0
        %581 = vrot.lane.b32.xlu0 %v577, 96
        %v582 = vpop.permute.xlu0 %581
        %vm583 = vcmask 130048
        %v584 = vsel %vm583, %v577, 0
        %v586 = vsel %vm583, %v582, 0
        %588 = vmatprep.subr.mxu0 0.0
        %589 = vmatpush1.xpose.msra.mxu0 %v586
        %590 = vmatprep.subr.mxu0 0.0
        %591 = vmatpush1.xpose.msra.mxu0 0.0
        %592 = vmatprep.subr.mxu0 0.0
        %593 = vmatpush1.xpose.msra.mxu0 0.0
        %594 = vmatprep.subr.mxu0 0.0
        %595 = vmatpush1.xpose.msra.mxu0 0.0
        %596 = vmatprep.subr.mxu0 0.0
        %597 = vmatpush1.xpose.msra.mxu0 0.0
        %598 = vmatprep.subr.mxu0 0.0
        %599 = vmatpush1.xpose.msra.mxu0 0.0
        %600 = vmatprep.subr.mxu0 0.0
        %601 = vmatpush1.xpose.msra.mxu0 0.0
        %602 = vmatprep.subr.mxu0 0.0
        %603 = vmatpush1.xpose.msra.mxu0 0.0
        %604 = vmatprep.subr.mxu0 0.0
        %605 = vmatpush1.xpose.msra.mxu0 0.0
        %606 = vmatprep.subr.mxu0 0.0
        %607 = vmatpush1.xpose.msra.mxu0 0.0
        %608 = vmatprep.subr.mxu0 0.0
        %609 = vmatpush1.xpose.msra.mxu0 0.0
        %610 = vmatprep.subr.mxu0 0.0
        %611 = vmatpush1.xpose.msra.mxu0 0.0
        %612 = vmatprep.subr.mxu0 0.0
        %613 = vmatpush1.xpose.msra.mxu0 0.0
        %614 = vmatprep.subr.mxu0 0.0
        %615 = vmatpush1.xpose.msra.mxu0 0.0
        %616 = vmatprep.subr.mxu0 0.0
        %617 = vmatpush1.xpose.msra.mxu0 0.0
        %618 = vmatprep.subr.mxu0 0.0
        %619 = vmatpush1.xpose.msra.mxu0 0.0
        %620 = vmatprep.subr.mxu0 0.0
        %621 = vmatpush1.xpose.msra.mxu0 0.0
        %622 = vmatprep.subr.mxu0 0.0
        %623 = vmatpush1.xpose.msra.mxu0 0.0
        %624 = vmatprep.subr.mxu0 0.0
        %625 = vmatpush1.xpose.msra.mxu0 0.0
        %626 = vmatprep.subr.mxu0 0.0
        %627 = vmatpush1.xpose.msra.mxu0 0.0
        %628 = vmatprep.subr.mxu0 0.0
        %629 = vmatpush1.xpose.msra.mxu0 0.0
        %630 = vmatprep.subr.mxu0 0.0
        %631 = vmatpush1.xpose.msra.mxu0 0.0
        %632 = vmatprep.subr.mxu0 0.0
        %633 = vmatpush1.xpose.msra.mxu0 0.0
        %634 = vmatprep.subr.mxu0 0.0
        %635 = vmatpush1.xpose.msra.mxu0 0.0
        %636 = vmatprep.subr.mxu0 0.0
        %637 = vmatpush1.xpose.msra.mxu0 0.0
        %638 = vmatprep.subr.mxu0 0.0
        %639 = vmatpush1.xpose.msra.mxu0 0.0
        %640 = vmatprep.subr.mxu0 0.0
        %641 = vmatpush1.xpose.msra.mxu0 0.0
        %642 = vmatprep.subr.mxu0 0.0
        %643 = vmatpush1.xpose.msra.mxu0 0.0
        %644 = vmatprep.subr.mxu0 0.0
        %645 = vmatpush1.xpose.msra.mxu0 0.0
        %646 = vmatprep.subr.mxu0 0.0
        %647 = vmatpush1.xpose.msra.mxu0 0.0
        %648 = vmatprep.subr.mxu0 0.0
        %649 = vmatpush1.xpose.msra.mxu0 0.0
        %650 = vmatprep.subr.mxu0 0.0
        %651 = vmatpush1.xpose.msra.mxu0 0.0
        %652 = vmatprep.mubr.f32.mxu0 0.0
        %653 = vmatmul.mubr.f32.gmra.mrb[0].mxu0 %v584
        %v654 = vpop.f32.mrb[0].mxu0
        %v655 = vadd.f32 0.0, %v654
        %v656 = vpop.f32.mrb[0].mxu0
        %657 = vdwg.mxu0
        %vm658 = vcmask 64512
        %v659 = vsel %vm658, %v655, -inf
        %660 = vmax.xlane.f32.xlu0 %v659
        %v661 = vpop.xlane.xlu0 %660
        %v662 = vsub.f32 %v655, %v661
        %v663 = vmul.f32 %v662, 1.442695
        %v664 = vpow.pop %v663
        %v665 = vsel %vm658, %v664, 0.0
        %666 = vadd.xlane.f32.xlu0 %v665
        %v667 = vpop.xlane.xlu0 %666
        %v668 = vrcp.pop %v667
        %v669 = vmul.f32 %v667, %v668
        %v670 = vsub.f32 2.0, %v669
        %v671 = vmul.f32 %v668, %v670
        %v672 = vmul.f32 %v664, %v671
        %673 = vrot.lane.b32.xlu0 %v577, 64
        %v674 = vpop.permute.xlu0 %673
        %v677 = vsel %vm658, %v672, 0
        %679 = vmatprep.subr.mxu0 0.0
        %680 = vmatpush1.msra.mxu0 %v674
        %681 = vmatprep.subr.mxu0 0.0
        %682 = vmatpush1.msra.mxu0 0.0
        %683 = vmatprep.subr.mxu0 0.0
        %684 = vmatpush1.msra.mxu0 0.0
        %685 = vmatprep.subr.mxu0 0.0
        %686 = vmatpush1.msra.mxu0 0.0
        %687 = vmatprep.subr.mxu0 0.0
        %688 = vmatpush1.msra.mxu0 0.0
        %689 = vmatprep.subr.mxu0 0.0
        %690 = vmatpush1.msra.mxu0 0.0
        %691 = vmatprep.subr.mxu0 0.0
        %692 = vmatpush1.msra.mxu0 0.0
        %693 = vmatprep.subr.mxu0 0.0
        %694 = vmatpush1.msra.mxu0 0.0
        %695 = vmatprep.subr.mxu0 0.0
        %696 = vmatpush1.msra.mxu0 0.0
        %697 = vmatprep.subr.mxu0 0.0
        %698 = vmatpush1.msra.mxu0 0.0
        %699 = vmatprep.subr.mxu0 0.0
        %700 = vmatpush1.msra.mxu0 0.0
        %701 = vmatprep.subr.mxu0 0.0
        %702 = vmatpush1.msra.mxu0 0.0
        %703 = vmatprep.subr.mxu0 0.0
        %704 = vmatpush1.msra.mxu0 0.0
        %705 = vmatprep.subr.mxu0 0.0
        %706 = vmatpush1.msra.mxu0 0.0
        %707 = vmatprep.subr.mxu0 0.0
        %708 = vmatpush1.msra.mxu0 0.0
        %709 = vmatprep.subr.mxu0 0.0
        %710 = vmatpush1.msra.mxu0 0.0
        %711 = vmatprep.subr.mxu0 0.0
        %712 = vmatpush1.msra.mxu0 0.0
        %713 = vmatprep.subr.mxu0 0.0
        %714 = vmatpush1.msra.mxu0 0.0
        %715 = vmatprep.subr.mxu0 0.0
        %716 = vmatpush1.msra.mxu0 0.0
        %717 = vmatprep.subr.mxu0 0.0
        %718 = vmatpush1.msra.mxu0 0.0
        %719 = vmatprep.subr.mxu0 0.0
        %720 = vmatpush1.msra.mxu0 0.0
        %721 = vmatprep.subr.mxu0 0.0
        %722 = vmatpush1.msra.mxu0 0.0
        %723 = vmatprep.subr.mxu0 0.0
        %724 = vmatpush1.msra.mxu0 0.0
        %725 = vmatprep.subr.mxu0 0.0
        %726 = vmatpush1.msra.mxu0 0.0
        %727 = vmatprep.subr.mxu0 0.0
        %728 = vmatpush1.msra.mxu0 0.0
        %729 = vmatprep.subr.mxu0 0.0
        %730 = vmatpush1.msra.mxu0 0.0
        %731 = vmatprep.subr.mxu0 0.0
        %732 = vmatpush1.msra.mxu0 0.0
        %733 = vmatprep.subr.mxu0 0.0
        %734 = vmatpush1.msra.mxu0 0.0
        %735 = vmatprep.subr.mxu0 0.0
        %736 = vmatpush1.msra.mxu0 0.0
        %737 = vmatprep.subr.mxu0 0.0
        %738 = vmatpush1.msra.mxu0 0.0
        %739 = vmatprep.subr.mxu0 0.0
        %740 = vmatpush1.msra.mxu0 0.0
        %741 = vmatprep.subr.mxu0 0.0
        %742 = vmatpush1.msra.mxu0 0.0
        %743 = vmatprep.mubr.f32.mxu0 0.0
        %744 = vmatmul.mubr.f32.gmra.mrb[0].mxu0 %v677
        %v745 = vpop.f32.mrb[0].mxu0
        %v746 = vadd.f32 0.0, %v745
        %v747 = vpop.f32.mrb[0].mxu0
        %748 = vdwg.mxu0
        %749 = vrot.lane.b32.xlu0 %v577, 112
        %v750 = vpop.permute.xlu0 %749
        %751 = vrot.lane.b32.xlu0 %v577, 80
        %v752 = vpop.permute.xlu0 %751
        %v753 = vsel %vm583, %v750, 0
        %v755 = vsel %vm583, %v752, 0
        %757 = vmatprep.subr.mxu0 0.0
        %758 = vmatpush1.xpose.msra.mxu0 %v755
        %759 = vmatprep.subr.mxu0 0.0
        %760 = vmatpush1.xpose.msra.mxu0 0.0
        %761 = vmatprep.subr.mxu0 0.0
        %762 = vmatpush1.xpose.msra.mxu0 0.0
        %763 = vmatprep.subr.mxu0 0.0
        %764 = vmatpush1.xpose.msra.mxu0 0.0
        %765 = vmatprep.subr.mxu0 0.0
        %766 = vmatpush1.xpose.msra.mxu0 0.0
        %767 = vmatprep.subr.mxu0 0.0
        %768 = vmatpush1.xpose.msra.mxu0 0.0
        %769 = vmatprep.subr.mxu0 0.0
        %770 = vmatpush1.xpose.msra.mxu0 0.0
        %771 = vmatprep.subr.mxu0 0.0
        %772 = vmatpush1.xpose.msra.mxu0 0.0
        %773 = vmatprep.subr.mxu0 0.0
        %774 = vmatpush1.xpose.msra.mxu0 0.0
        %775 = vmatprep.subr.mxu0 0.0
        %776 = vmatpush1.xpose.msra.mxu0 0.0
        %777 = vmatprep.subr.mxu0 0.0
        %778 = vmatpush1.xpose.msra.mxu0 0.0
        %779 = vmatprep.subr.mxu0 0.0
        %780 = vmatpush1.xpose.msra.mxu0 0.0
        %781 = vmatprep.subr.mxu0 0.0
        %782 = vmatpush1.xpose.msra.mxu0 0.0
        %783 = vmatprep.subr.mxu0 0.0
        %784 = vmatpush1.xpose.msra.mxu0 0.0
        %785 = vmatprep.subr.mxu0 0.0
        %786 = vmatpush1.xpose.msra.mxu0 0.0
        %787 = vmatprep.subr.mxu0 0.0
        %788 = vmatpush1.xpose.msra.mxu0 0.0
        %789 = vmatprep.subr.mxu0 0.0
        %790 = vmatpush1.xpose.msra.mxu0 0.0
        %791 = vmatprep.subr.mxu0 0.0
        %792 = vmatpush1.xpose.msra.mxu0 0.0
        %793 = vmatprep.subr.mxu0 0.0
        %794 = vmatpush1.xpose.msra.mxu0 0.0
        %795 = vmatprep.subr.mxu0 0.0
        %796 = vmatpush1.xpose.msra.mxu0 0.0
        %797 = vmatprep.subr.mxu0 0.0
        %798 = vmatpush1.xpose.msra.mxu0 0.0
        %799 = vmatprep.subr.mxu0 0.0
        %800 = vmatpush1.xpose.msra.mxu0 0.0
        %801 = vmatprep.subr.mxu0 0.0
        %802 = vmatpush1.xpose.msra.mxu0 0.0
        %803 = vmatprep.subr.mxu0 0.0
        %804 = vmatpush1.xpose.msra.mxu0 0.0
        %805 = vmatprep.subr.mxu0 0.0
        %806 = vmatpush1.xpose.msra.mxu0 0.0
        %807 = vmatprep.subr.mxu0 0.0
        %808 = vmatpush1.xpose.msra.mxu0 0.0
        %809 = vmatprep.subr.mxu0 0.0
        %810 = vmatpush1.xpose.msra.mxu0 0.0
        %811 = vmatprep.subr.mxu0 0.0
        %812 = vmatpush1.xpose.msra.mxu0 0.0
        %813 = vmatprep.subr.mxu0 0.0
        %814 = vmatpush1.xpose.msra.mxu0 0.0
        %815 = vmatprep.subr.mxu0 0.0
        %816 = vmatpush1.xpose.msra.mxu0 0.0
        %817 = vmatprep.subr.mxu0 0.0
        %818 = vmatpush1.xpose.msra.mxu0 0.0
        %819 = vmatprep.subr.mxu0 0.0
        %820 = vmatpush1.xpose.msra.mxu0 0.0
        %821 = vmatprep.mubr.f32.mxu0 0.0
        %822 = vmatmul.mubr.f32.gmra.mrb[0].mxu0 %v753
        %v823 = vpop.f32.mrb[0].mxu0
        %v824 = vadd.f32 0.0, %v823
        %v825 = vpop.f32.mrb[0].mxu0
        %826 = vdwg.mxu0
        %v827 = vsel %vm658, %v824, -inf
        %828 = vmax.xlane.f32.xlu0 %v827
        %v829 = vpop.xlane.xlu0 %828
        %v830 = vsub.f32 %v824, %v829
        %v831 = vmul.f32 %v830, 1.442695
        %v832 = vpow.pop %v831
        %v833 = vsel %vm658, %v832, 0.0
        %834 = vadd.xlane.f32.xlu0 %v833
        %v835 = vpop.xlane.xlu0 %834
        %v836 = vrcp.pop %v835
        %v837 = vmul.f32 %v835, %v836
        %v838 = vsub.f32 2.0, %v837
        %v839 = vmul.f32 %v836, %v838
        %v840 = vmul.f32 %v832, %v839
        %841 = vrot.lane.b32.xlu0 %v577, 48
        %v842 = vpop.permute.xlu0 %841
        %v845 = vsel %vm658, %v840, 0
        %847 = vmatprep.subr.mxu0 0.0
        %848 = vmatpush1.msra.mxu0 %v842
        %849 = vmatprep.subr.mxu0 0.0
        %850 = vmatpush1.msra.mxu0 0.0
        %851 = vmatprep.subr.mxu0 0.0
        %852 = vmatpush1.msra.mxu0 0.0
        %853 = vmatprep.subr.mxu0 0.0
        %854 = vmatpush1.msra.mxu0 0.0
        %855 = vmatprep.subr.mxu0 0.0
        %856 = vmatpush1.msra.mxu0 0.0
        %857 = vmatprep.subr.mxu0 0.0
        %858 = vmatpush1.msra.mxu0 0.0
        %859 = vmatprep.subr.mxu0 0.0
        %860 = vmatpush1.msra.mxu0 0.0
        %861 = vmatprep.subr.mxu0 0.0
        %862 = vmatpush1.msra.mxu0 0.0
        %863 = vmatprep.subr.mxu0 0.0
        %864 = vmatpush1.msra.mxu0 0.0
        %865 = vmatprep.subr.mxu0 0.0
        %866 = vmatpush1.msra.mxu0 0.0
        %867 = vmatprep.subr.mxu0 0.0
        %868 = vmatpush1.msra.mxu0 0.0
        %869 = vmatprep.subr.mxu0 0.0
        %870 = vmatpush1.msra.mxu0 0.0
        %871 = vmatprep.subr.mxu0 0.0
        %872 = vmatpush1.msra.mxu0 0.0
        %873 = vmatprep.subr.mxu0 0.0
        %874 = vmatpush1.msra.mxu0 0.0
        %875 = vmatprep.subr.mxu0 0.0
        %876 = vmatpush1.msra.mxu0 0.0
        %877 = vmatprep.subr.mxu0 0.0
        %878 = vmatpush1.msra.mxu0 0.0
        %879 = vmatprep.subr.mxu0 0.0
        %880 = vmatpush1.msra.mxu0 0.0
        %881 = vmatprep.subr.mxu0 0.0
        %882 = vmatpush1.msra.mxu0 0.0
        %883 = vmatprep.subr.mxu0 0.0
        %884 = vmatpush1.msra.mxu0 0.0
        %885 = vmatprep.subr.mxu0 0.0
        %886 = vmatpush1.msra.mxu0 0.0
        %887 = vmatprep.subr.mxu0 0.0
        %888 = vmatpush1.msra.mxu0 0.0
        %889 = vmatprep.subr.mxu0 0.0
        %890 = vmatpush1.msra.mxu0 0.0
        %891 = vmatprep.subr.mxu0 0.0
        %892 = vmatpush1.msra.mxu0 0.0
        %893 = vmatprep.subr.mxu0 0.0
        %894 = vmatpush1.msra.mxu0 0.0
        %895 = vmatprep.subr.mxu0 0.0
        %896 = vmatpush1.msra.mxu0 0.0
        %897 = vmatprep.subr.mxu0 0.0
        %898 = vmatpush1.msra.mxu0 0.0
        %899 = vmatprep.subr.mxu0 0.0
        %900 = vmatpush1.msra.mxu0 0.0
        %901 = vmatprep.subr.mxu0 0.0
        %902 = vmatpush1.msra.mxu0 0.0
        %903 = vmatprep.subr.mxu0 0.0
        %904 = vmatpush1.msra.mxu0 0.0
        %905 = vmatprep.subr.mxu0 0.0
        %906 = vmatpush1.msra.mxu0 0.0
        %907 = vmatprep.subr.mxu0 0.0
        %908 = vmatpush1.msra.mxu0 0.0
        %909 = vmatprep.subr.mxu0 0.0
        %910 = vmatpush1.msra.mxu0 0.0
        %911 = vmatprep.mubr.f32.mxu0 0.0
        %912 = vmatmul.mubr.f32.gmra.mrb[0].mxu0 %v845
        %v913 = vpop.f32.mrb[0].mxu0
        %v914 = vadd.f32 0.0, %v913
        %v915 = vpop.f32.mrb[0].mxu0
        %916 = vdwg.mxu0
        %918 = vrot.lane.b32.xlu0 %v914, 16
        %v919 = vpop.permute.xlu0 %918
        %v921 = vsel %vm583, %v746, %v919
        %v922 = vld [vmem:[%s3] sm:$0xff]
        %v923 = vld [vmem:[%s3 + $0x8] sm:$0xff]
        %v924 = vld [vmem:[%s3 + $0x10] sm:$0xff]
        %v925 = vld [vmem:[%s3 + $0x18] sm:$0xff]
        %v926 = vld [vmem:[%s4] sm:$0x1]
        %v928 = vlaneseq
        %v929 = vshrl.u32 %v928, 7
        %v930 = vsub.s32 0, %v929
        %v931 = vrot.slane %v926, %v930
        %v934 = vsel %vm506, %v921, 0
        %936 = vmatprep.subr.mxu0 0.0
        %937 = vmatpush1.msra.mxu0 %v922
        %938 = vmatprep.subr.mxu0 0.0
        %939 = vmatpush1.msra.mxu0 %v923
        %940 = vmatprep.subr.mxu0 0.0
        %941 = vmatpush1.msra.mxu0 %v924
        %942 = vmatprep.subr.mxu0 0.0
        %943 = vmatpush1.msra.mxu0 %v925
        %944 = vmatprep.subr.mxu0 0.0
        %945 = vmatpush1.msra.mxu0 0.0
        %946 = vmatprep.subr.mxu0 0.0
        %947 = vmatpush1.msra.mxu0 0.0
        %948 = vmatprep.subr.mxu0 0.0
        %949 = vmatpush1.msra.mxu0 0.0
        %950 = vmatprep.subr.mxu0 0.0
        %951 = vmatpush1.msra.mxu0 0.0
        %952 = vmatprep.subr.mxu0 0.0
        %953 = vmatpush1.msra.mxu0 0.0
        %954 = vmatprep.subr.mxu0 0.0
        %955 = vmatpush1.msra.mxu0 0.0
        %956 = vmatprep.subr.mxu0 0.0
        %957 = vmatpush1.msra.mxu0 0.0
        %958 = vmatprep.subr.mxu0 0.0
        %959 = vmatpush1.msra.mxu0 0.0
        %960 = vmatprep.subr.mxu0 0.0
        %961 = vmatpush1.msra.mxu0 0.0
        %962 = vmatprep.subr.mxu0 0.0
        %963 = vmatpush1.msra.mxu0 0.0
        %964 = vmatprep.subr.mxu0 0.0
        %965 = vmatpush1.msra.mxu0 0.0
        %966 = vmatprep.subr.mxu0 0.0
        %967 = vmatpush1.msra.mxu0 0.0
        %968 = vmatprep.subr.mxu0 0.0
        %969 = vmatpush1.msra.mxu0 0.0
        %970 = vmatprep.subr.mxu0 0.0
        %971 = vmatpush1.msra.mxu0 0.0
        %972 = vmatprep.subr.mxu0 0.0
        %973 = vmatpush1.msra.mxu0 0.0
        %974 = vmatprep.subr.mxu0 0.0
        %975 = vmatpush1.msra.mxu0 0.0
        %976 = vmatprep.subr.mxu0 0.0
        %977 = vmatpush1.msra.mxu0 0.0
        %978 = vmatprep.subr.mxu0 0.0
        %979 = vmatpush1.msra.mxu0 0.0
        %980 = vmatprep.subr.mxu0 0.0
        %981 = vmatpush1.msra.mxu0 0.0
        %982 = vmatprep.subr.mxu0 0.0
        %983 = vmatpush1.msra.mxu0 0.0
        %984 = vmatprep.subr.mxu0 0.0
        %985 = vmatpush1.msra.mxu0 0.0
        %986 = vmatprep.subr.mxu0 0.0
        %987 = vmatpush1.msra.mxu0 0.0
        %988 = vmatprep.subr.mxu0 0.0
        %989 = vmatpush1.msra.mxu0 0.0
        %990 = vmatprep.subr.mxu0 0.0
        %991 = vmatpush1.msra.mxu0 0.0
        %992 = vmatprep.subr.mxu0 0.0
        %993 = vmatpush1.msra.mxu0 0.0
        %994 = vmatprep.subr.mxu0 0.0
        %995 = vmatpush1.msra.mxu0 0.0
        %996 = vmatprep.subr.mxu0 0.0
        %997 = vmatpush1.msra.mxu0 0.0
        %998 = vmatprep.subr.mxu0 0.0
        %999 = vmatpush1.msra.mxu0 0.0
        %1000 = vmatprep.mubr.f32.mxu0 0.0
        %1001 = vmatmul.mubr.f32.gmra.mrb[0].mxu0 %v934
        %v1002 = vpop.f32.mrb[0].mxu0
        %v1003 = vadd.f32 %v931, %v1002
        %v1004 = vpop.f32.mrb[0].mxu0
        %1005 = vdwg.mxu0
        %v1006 = vadd.f32 %v494, %v1003
        %v1007 = vld [vmem:[#allocation5] sm:$0x1]
        %v1008 = vld [vmem:[#allocation7] sm:$0x1]
        %v1009 = vsel %vm506, %v1006, 0.0
        %1010 = vadd.xlane.f32.xlu0 %v1009
        %v1011 = vpop.xlane.xlu0 %1010
        %v1012 = vmul.f32 %v1011, 0.03125
        %v1013 = vsub.f32 %v1006, %v1012
        %v1014 = vmul.f32 %v1013, %v1013
        %v1015 = vsel %vm506, %v1014, 0.0
        %1016 = vadd.xlane.f32.xlu0 %v1015
        %v1017 = vpop.xlane.xlu0 %1016
        %v1018 = vmul.f32 %v1017, 0.03125
        %v1019 = vadd.f32 %v1018, 1e-05
        %v1020 = vrsqrt.pop %v1019
        %v1021 = vmul.f32 %v1013, %v1020
        %v1023 = vlaneseq
        %v1024 = vshrl.u32 %v1023, 7
        %v1025 = vsub.s32 0, %v1024
        %v1026 = vrot.slane %v1007, %v1025
        %v1028 = vmul.f32 %v1021, %v1026
        %v1030 = vlaneseq
        %v1031 = vshrl.u32 %v1030, 7
        %v1032 = vsub.s32 0, %v1031
        %v1033 = vrot.slane %v1008, %v1032
        %v1035 = vadd.f32 %v1028, %v1033
        %v1036 = vld [vmem:[%s7] sm:$0xff]
        %v1037 = vld [vmem:[%s7 + $0x8] sm:$0xff]
        %v1038 = vld [vmem:[%s7 + $0x10] sm:$0xff]
        %v1039 = vld [vmem:[%s7 + $0x18] sm:$0xff]
        %v1040 = vld [vmem:[#allocation8] sm:$0x1]
        %v1042 = vlaneseq
        %v1043 = vshrl.u32 %v1042, 7
        %v1044 = vsub.s32 0, %v1043
        %v1045 = vrot.slane %v1040, %v1044
        %v1048 = vsel %vm506, %v1035, 0
        %1050 = vmatprep.subr.mxu0 0.0
        %1051 = vmatpush1.msra.mxu0 %v1036
        %1052 = vmatprep.subr.mxu0 0.0
        %1053 = vmatpush1.msra.mxu0 %v1037
        %1054 = vmatprep.subr.mxu0 0.0
        %1055 = vmatpush1.msra.mxu0 %v1038
        %1056 = vmatprep.subr.mxu0 0.0
        %1057 = vmatpush1.msra.mxu0 %v1039
        %1058 = vmatprep.subr.mxu0 0.0
        %1059 = vmatpush1.msra.mxu0 0.0
        %1060 = vmatprep.subr.mxu0 0.0
        %1061 = vmatpush1.msra.mxu0 0.0
        %1062 = vmatprep.subr.mxu0 0.0
        %1063 = vmatpush1.msra.mxu0 0.0
        %1064 = vmatprep.subr.mxu0 0.0
        %1065 = vmatpush1.msra.mxu0 0.0
        %1066 = vmatprep.subr.mxu0 0.0
        %1067 = vmatpush1.msra.mxu0 0.0
        %1068 = vmatprep.subr.mxu0 0.0
        %1069 = vmatpush1.msra.mxu0 0.0
        %1070 = vmatprep.subr.mxu0 0.0
        %1071 = vmatpush1.msra.mxu0 0.0
        %1072 = vmatprep.subr.mxu0 0.0
        %1073 = vmatpush1.msra.mxu0 0.0
        %1074 = vmatprep.subr.mxu0 0.0
        %1075 = vmatpush1.msra.mxu0 0.0
        %1076 = vmatprep.subr.mxu0 0.0
        %1077 = vmatpush1.msra.mxu0 0.0
        %1078 = vmatprep.subr.mxu0 0.0
        %1079 = vmatpush1.msra.mxu0 0.0
        %1080 = vmatprep.subr.mxu0 0.0
        %1081 = vmatpush1.msra.mxu0 0.0
        %1082 = vmatprep.subr.mxu0 0.0
        %1083 = vmatpush1.msra.mxu0 0.0
        %1084 = vmatprep.subr.mxu0 0.0
        %1085 = vmatpush1.msra.mxu0 0.0
        %1086 = vmatprep.subr.mxu0 0.0
        %1087 = vmatpush1.msra.mxu0 0.0
        %1088 = vmatprep.subr.mxu0 0.0
        %1089 = vmatpush1.msra.mxu0 0.0
        %1090 = vmatprep.subr.mxu0 0.0
        %1091 = vmatpush1.msra.mxu0 0.0
        %1092 = vmatprep.subr.mxu0 0.0
        %1093 = vmatpush1.msra.mxu0 0.0
        %1094 = vmatprep.subr.mxu0 0.0
        %1095 = vmatpush1.msra.mxu0 0.0
        %1096 = vmatprep.subr.mxu0 0.0
        %1097 = vmatpush1.msra.mxu0 0.0
        %1098 = vmatprep.subr.mxu0 0.0
        %1099 = vmatpush1.msra.mxu0 0.0
        %1100 = vmatprep.subr.mxu0 0.0
        %1101 = vmatpush1.msra.mxu0 0.0
        %1102 = vmatprep.subr.mxu0 0.0
        %1103 = vmatpush1.msra.mxu0 0.0
        %1104 = vmatprep.subr.mxu0 0.0
        %1105 = vmatpush1.msra.mxu0 0.0
        %1106 = vmatprep.subr.mxu0 0.0
        %1107 = vmatpush1.msra.mxu0 0.0
        %1108 = vmatprep.subr.mxu0 0.0
        %1109 = vmatpush1.msra.mxu0 0.0
        %1110 = vmatprep.subr.mxu0 0.0
        %1111 = vmatpush1.msra.mxu0 0.0
        %1112 = vmatprep.subr.mxu0 0.0
        %1113 = vmatpush1.msra.mxu0 0.0
        %1114 = vmatprep.mubr.f32.mxu0 0.0
        %1115 = vmatmul.mubr.f32.gmra.mrb[0].mxu0 %v1048
        %v1116 = vpop.f32.mrb[0].mxu0
        %v1117 = vadd.f32 %v1045, %v1116
        %v1118 = vpop.f32.mrb[0].mxu0
        %1119 = vdwg.mxu0
        %v1120 = vmul.f32 %v1117, 0.5
        %v1121 = vmul.f32 %v1117, 0.70710677
        %v1122 = verf.f32.pop %v1121
        %v1123 = vadd.f32 %v1122, 1.0
        %v1124 = vmul.f32 %v1120, %v1123
        %v1125 = vld [vmem:[%s9] sm:$0xff]
        %v1126 = vld [vmem:[%s9 + $0x8] sm:$0xff]
        %v1127 = vld [vmem:[%s9 + $0x10] sm:$0xff]
        %v1128 = vld [vmem:[%s9 + $0x18] sm:$0xff]
        %v1129 = vld [vmem:[%s9 + $0x20] sm:$0xff]
        %v1130 = vld [vmem:[%s9 + $0x28] sm:$0xff]
        %v1131 = vld [vmem:[%s9 + $0x30] sm:$0xff]
        %v1132 = vld [vmem:[%s9 + $0x38] sm:$0xff]
        %v1133 = vld [vmem:[%s10] sm:$0x1]
        %v1135 = vlaneseq
        %v1136 = vshrl.u32 %v1135, 7
        %v1137 = vsub.s32 0, %v1136
        %v1138 = vrot.slane %v1133, %v1137
        %vm1140 = vcmask 523264
        %v1142 = vsel %vm1140, %v1124, 0
        %1144 = vmatprep.subr.mxu0 0.0
        %1145 = vmatpush1.msra.mxu0 %v1125
        %1146 = vmatprep.subr.mxu0 0.0
        %1147 = vmatpush1.msra.mxu0 %v1126
        %1148 = vmatprep.subr.mxu0 0.0
        %1149 = vmatpush1.msra.mxu0 %v1127
        %1150 = vmatprep.subr.mxu0 0.0
        %1151 = vmatpush1.msra.mxu0 %v1128
        %1152 = vmatprep.subr.mxu0 0.0
        %1153 = vmatpush1.msra.mxu0 %v1129
        %1154 = vmatprep.subr.mxu0 0.0
        %1155 = vmatpush1.msra.mxu0 %v1130
        %1156 = vmatprep.subr.mxu0 0.0
        %1157 = vmatpush1.msra.mxu0 %v1131
        %1158 = vmatprep.subr.mxu0 0.0
        %1159 = vmatpush1.msra.mxu0 %v1132
        %1160 = vmatprep.subr.mxu0 0.0
        %1161 = vmatpush1.msra.mxu0 0.0
        %1162 = vmatprep.subr.mxu0 0.0
        %1163 = vmatpush1.msra.mxu0 0.0
        %1164 = vmatprep.subr.mxu0 0.0
        %1165 = vmatpush1.msra.mxu0 0.0
        %1166 = vmatprep.subr.mxu0 0.0
        %1167 = vmatpush1.msra.mxu0 0.0
        %1168 = vmatprep.subr.mxu0 0.0
        %1169 = vmatpush1.msra.mxu0 0.0
        %1170 = vmatprep.subr.mxu0 0.0
        %1171 = vmatpush1.msra.mxu0 0.0
        %1172 = vmatprep.subr.mxu0 0.0
        %1173 = vmatpush1.msra.mxu0 0.0
        %1174 = vmatprep.subr.mxu0 0.0
        %1175 = vmatpush1.msra.mxu0 0.0
        %1176 = vmatprep.subr.mxu0 0.0
        %1177 = vmatpush1.msra.mxu0 0.0
        %1178 = vmatprep.subr.mxu0 0.0
        %1179 = vmatpush1.msra.mxu0 0.0
        %1180 = vmatprep.subr.mxu0 0.0
        %1181 = vmatpush1.msra.mxu0 0.0
        %1182 = vmatprep.subr.mxu0 0.0
        %1183 = vmatpush1.msra.mxu0 0.0
        %1184 = vmatprep.subr.mxu0 0.0
        %1185 = vmatpush1.msra.mxu0 0.0
        %1186 = vmatprep.subr.mxu0 0.0
        %1187 = vmatpush1.msra.mxu0 0.0
        %1188 = vmatprep.subr.mxu0 0.0
        %1189 = vmatpush1.msra.mxu0 0.0
        %1190 = vmatprep.subr.mxu0 0.0
        %1191 = vmatpush1.msra.mxu0 0.0
        %1192 = vmatprep.subr.mxu0 0.0
        %1193 = vmatpush1.msra.mxu0 0.0
        %1194 = vmatprep.subr.mxu0 0.0
        %1195 = vmatpush1.msra.mxu0 0.0
        %1196 = vmatprep.subr.mxu0 0.0
        %1197 = vmatpush1.msra.mxu0 0.0
        %1198 = vmatprep.subr.mxu0 0.0
        %1199 = vmatpush1.msra.mxu0 0.0
        %1200 = vmatprep.subr.mxu0 0.0
        %1201 = vmatpush1.msra.mxu0 0.0
        %1202 = vmatprep.subr.mxu0 0.0
        %1203 = vmatpush1.msra.mxu0 0.0
        %1204 = vmatprep.subr.mxu0 0.0
        %1205 = vmatpush1.msra.mxu0 0.0
        %1206 = vmatprep.subr.mxu0 0.0
        %1207 = vmatpush1.msra.mxu0 0.0
        %1208 = vmatprep.mubr.f32.mxu0 0.0
        %1209 = vmatmul.mubr.f32.gmra.mrb[0].mxu0 %v1142
        %v1210 = vpop.f32.mrb[0].mxu0
        %v1211 = vadd.f32 %v1138, %v1210
        %v1212 = vpop.f32.mrb[0].mxu0
        %1213 = vdwg.mxu0
        %v1214 = vadd.f32 %v1035, %v1211
        %v1215 = vld [vmem:[%s11] sm:$0x1]
        %v1216 = vld [vmem:[%s12] sm:$0x1]
        %v1217 = vsel %vm506, %v1214, 0.0
        %1218 = vadd.xlane.f32.xlu0 %v1217
        %v1219 = vpop.xlane.xlu0 %1218
        %v1220 = vmul.f32 %v1219, 0.03125
        %v1221 = vsub.f32 %v1214, %v1220
        %v1222 = vmul.f32 %v1221, %v1221
        %v1223 = vsel %vm506, %v1222, 0.0
        %1224 = vadd.xlane.f32.xlu0 %v1223
        %v1225 = vpop.xlane.xlu0 %1224
        %v1226 = vmul.f32 %v1225, 0.03125
        %v1227 = vadd.f32 %v1226, 1e-05
        %v1228 = vrsqrt.pop %v1227
        %v1229 = vmul.f32 %v1221, %v1228
        %v1231 = vlaneseq
        %v1232 = vshrl.u32 %v1231, 7
        %v1233 = vsub.s32 0, %v1232
        %v1234 = vrot.slane %v1215, %v1233
        %v1236 = vmul.f32 %v1229, %v1234
        %v1238 = vlaneseq
        %v1239 = vshrl.u32 %v1238, 7
        %v1240 = vsub.s32 0, %v1239
        %v1241 = vrot.slane %v1216, %v1240
        %v1243 = vadd.f32 %v1236, %v1241
        %1244 = vst.msk [vmem:[%s493] sm:$0xff] %vm506, %v1243
        %s1245 = sand.u32 %s318, 1
        %s1246 = scalar_lea.sflag [#allocation4], %s1245
        %s1247 = sand.u32 %s318, 1
        %s1248 = smul.addr %s1247, 8
        %s1249 = scalar_lea.vmem [#allocation10], %s1248
        // Predicated region
        $region89: #{tpu_custom_call.1} parent=71 // pred_check
          %p1250 = pneg %p328
        $region90: #{tpu_custom_call.1} parent=71 // pred_check_branch
          %1252 = sbr.rel (%p1250) target = $region92
        $region91: #{tpu_custom_call.1} parent=71 // pred_region
          %s1254 = ssub.s32 128, 128
          %1255 = vsyncadd %s1246, %s1254
          %s1256 = smul.addr %s32, 128
          %s1257 = scalar_lea.hbm %s13, %s1256
          %s1259 = sshll.u32 %s1249, 4
          %s1260 = int_to_ptr.vmem [resolvable:$true] %s1259
          %1262 = dma.vmem_to_hbm [thread:$0]  %s1260, 128, %s1257, %s1246
        $region92: #{tpu_custom_call.1} parent=71 // pred_fallthru
          _
      $region72: #{tpu_custom_call.1} parent=5 // pred_fallthru
        _
      %p1263 = scmp.le.s32.totalorder 2, %s27
      // Predicated region
      $region93: #{tpu_custom_call.1} parent=5 // pred_check
        %p1264 = pneg %p1263
      $region94: #{tpu_custom_call.1} parent=5 // pred_check_branch
        %1266 = sbr.rel (%p1264) target = $region96
      $region95: #{tpu_custom_call.1} parent=5 // pred_region
        %s1267 = ssub.s32 %s27, 2
        // Predicated region
        $region97: #{tpu_custom_call.1} parent=95 // pred_check
          %p1268 = pneg %p334
        $region98: #{tpu_custom_call.1} parent=95 // pred_check_branch
          %1270 = sbr.rel (%p1268) target = $region100
        $region99: #{tpu_custom_call.1} parent=95 // pred_region
          %s1271 = sand.u32 %s319, 1
          %s1272 = scalar_lea.sflag [#allocation4], %s1271
          %s1273 = sand.u32 %s319, 1
          %s1274 = smul.addr %s1273, 8
          %s1275 = scalar_lea.vmem [#allocation10], %s1274
          %1276 = dma.done %s1272, 128
        $region100: #{tpu_custom_call.1} parent=95 // pred_fallthru
          _
      $region96: #{tpu_custom_call.1} parent=5 // pred_fallthru
        _
    $region6: #{tpu_custom_call.1} parent=1 // loop_footer
      %s31 = sadd.s32 1, %s27
    $region7: #{tpu_custom_call.1} parent=1 // loop_footer_branch
      %26 = sbr.rel target = $region3
    $region8: #{tpu_custom_call.1} parent=1 // loop_exit
      _
    %1277 = vsyncpa [#allocation3], 1
    %s1278 = scalar_lea.sflag [#allocation3], 1
    %1279 = vsyncpa %s1278, 1
    %1280 = vsyncpa [#allocation6], 1
    %1281 = vsyncpa [#allocation9], 1
    %1282 = vsyncpa [#allocation4], 1
    %s1283 = scalar_lea.sflag [#allocation4], 1
    %1284 = vsyncpa %s1283, 1

</llo_original>
